<compile_context>
chip_gen: v5e
topology: v5e:2x2
jax: 0.10.0
libtpu: 0.0.40
codegen_flags: <defaults>
</compile_context>

<pallas_src>
import math
import functools

import jax
import jax.numpy as jnp
from jax.experimental import pallas as pl
from jax.experimental.pallas import tpu as pltpu


def _dpsr_kernel(x_ref, mask_ref, wqkv_ref, bqkv_ref, w1_ref, b1_ref,
                 gamma_ref, beta_ref, o_ref, *,
                 seq, emb, heads, head_dim, n_blocks, ln_eps):
    S, E, H, Dh, G = seq, emb, heads, head_dim, n_blocks
    x = x_ref[...]                                             # (G*S, E)

    # ---- Fused Q/K/V projection (one MXU weight push).  1/sqrt(Dh) is already
    # folded into the Q columns of wqkv/bqkv.
    qkv = jnp.dot(x, wqkv_ref[...], preferred_element_type=jnp.float32) + bqkv_ref[...]

    # ---- Head stacks built straight from qkv columns (no intermediate q/k/v
    # slices).  Row order: (block g, head h, seq s) -> (G*H*S, Dh).  Static
    # slices + concatenate (guaranteed lowering on Mosaic, no general reshape).
    def stack(col0):
        return jnp.concatenate(
            [qkv[g * S:(g + 1) * S, col0 + h * Dh: col0 + (h + 1) * Dh]
             for g in range(G) for h in range(H)], axis=0)

    q_s = stack(0)                                             # (G*H*S, Dh)
    k_s = stack(E)
    v_s = stack(2 * E)

    # ---- One block-diagonal-masked score matmul, contracting on Dh (no k.T).
    scores = jax.lax.dot_general(q_s, k_s, (((1,), (1,)), ((), ())),
                                 preferred_element_type=jnp.float32)
    scores = scores + mask_ref[...]        # precomputed additive 0 / -1e30 bias

    # ---- Numerically-stable softmax; divide goes to the EUP (approx reciprocal).
    m = jnp.max(scores, axis=-1, keepdims=True)
    e = jnp.exp(scores - m)
    probs = e * pl.reciprocal(jnp.sum(e, axis=-1, keepdims=True), approx=True)
    # TODO(synk): nn.Dropout on attention probs is identity in eval mode; not applied.

    ctx_s = jnp.dot(probs, v_s, preferred_element_type=jnp.float32)   # (G*H*S, Dh)

    # ---- Un-stack heads back to (G*S, E): columns ordered [head0 | head1 | ...].
    ctx = jnp.concatenate(
        [jnp.concatenate(
            [ctx_s[(g * H + h) * S:(g * H + h + 1) * S, :] for h in range(H)],
            axis=1)
         for g in range(G)], axis=0)

    # ---- Residual dense with the identity folded host-side (w1' = I + w1).
    out = jnp.dot(ctx, w1_ref[...], preferred_element_type=jnp.float32) + b1_ref[...]

    # ---- LayerNorm over the embedding dim, single-pass statistics.
    mean = jnp.mean(out, axis=-1, keepdims=True)
    meansq = jnp.mean(out * out, axis=-1, keepdims=True)
    var = meansq - mean * mean
    y = (out - mean) * jax.lax.rsqrt(var + ln_eps) * gamma_ref[...] + beta_ref[...]

    o_ref[...] = y.astype(o_ref.dtype)


def _is_multi_tensorcore_chip():
    """v7x chips have 2 TensorCores -> keep a batch-parallel grid there."""
    try:
        kind = jax.devices()[0].device_kind.lower()
    except Exception:
        return False
    return "7" in kind


def dpsr_forward(x, fused, *, heads, fold_batch=None, ln_eps=1e-5):
    """x: (B, S, E) float32.  fused: dict from fuse_params()."""
    B, S, E = x.shape
    Dh = E // heads
    if fold_batch is None:
        # Single-TC v5e/v6e: fold the batch into one grid step (halves fixed
        # per-step overhead, doubles sublane utilization).  2-TC v7x: keep the
        # (B,) parallel grid so each core takes one batch element.
        fold_batch = not _is_multi_tensorcore_chip()

    if fold_batch:
        n_steps, n_blocks = 1, B
    else:
        n_steps, n_blocks = B, 1

    rows = n_blocks * S
    x_v = x.reshape(n_steps, rows, E)          # free: row-major layout identical

    # Additive block-diagonal mask (0 inside each (batch,head) block of size S,
    # -1e30 elsewhere), built once host-side.
    n = n_blocks * heads * S
    blk = jnp.arange(n, dtype=jnp.int32) // S
    mask = jnp.where(blk[:, None] == blk[None, :], 0.0, -1e30).astype(jnp.float32)

    kernel = functools.partial(_dpsr_kernel, seq=S, emb=E, heads=heads,
                               head_dim=Dh, n_blocks=n_blocks, ln_eps=ln_eps)

    def run(single_buffer_weights):
        def inv(shape):
            zero = lambda i: (0,) * len(shape)
            if single_buffer_weights:
                # Grid-invariant parameters: single-buffer so the spec stays
                # within v7x's 64 MiB VMEM budget when E scales up.
                return pl.BlockSpec(shape, zero, pipeline_mode=pl.Buffered(1))
            return pl.BlockSpec(shape, zero)

        return pl.pallas_call(
            kernel,
            out_shape=jax.ShapeDtypeStruct((n_steps, rows, E), x.dtype),
            grid_spec=pltpu.PrefetchScalarGridSpec(
                num_scalar_prefetch=0,
                grid=(n_steps,),
                in_specs=[
                    pl.BlockSpec((None, rows, E), lambda i: (i, 0, 0)),  # x
                    inv((n, n)),                                         # mask bias
                    inv((E, 3 * E)), inv((1, 3 * E)),                    # Wqkv, bqkv
                    inv((E, E)), inv((1, E)),                            # W1'=I+W1, b1
                    inv((1, E)), inv((1, E)),                            # gamma, beta
                ],
                out_specs=pl.BlockSpec((None, rows, E), lambda i: (i, 0, 0)),
            ),
            compiler_params=pltpu.CompilerParams(
                dimension_semantics=("parallel",)),
        )(x_v, mask, fused["wqkv"], fused["bqkv"], fused["w1p"], fused["b1"],
          fused["gamma"], fused["beta"])

    try:
        out = run(single_buffer_weights=True)
    except Exception:
        # pl.Buffered(1) unsupported by this JAX build; default double-buffering
        # is harmless at these shapes.
        out = run(single_buffer_weights=False)
    return out.reshape(B, S, E)


def init_params(key, emb):
    """Deterministic synthetic parameters (shapes match DPSR.__init__)."""
    ks = jax.random.split(key, 8)
    s = 0.05
    return {
        "wq": jax.random.normal(ks[0], (emb, emb), jnp.float32) * s,
        "bq": jax.random.normal(ks[1], (1, emb), jnp.float32) * s,
        "wk": jax.random.normal(ks[2], (emb, emb), jnp.float32) * s,
        "bk": jax.random.normal(ks[3], (1, emb), jnp.float32) * s,
        "wv": jax.random.normal(ks[4], (emb, emb), jnp.float32) * s,
        "bv": jax.random.normal(ks[5], (1, emb), jnp.float32) * s,
        "w1": jax.random.normal(ks[6], (emb, emb), jnp.float32) * s,
        "b1": jax.random.normal(ks[7], (1, emb), jnp.float32) * s,
        "gamma": jnp.ones((1, emb), jnp.float32),
        "beta": jnp.zeros((1, emb), jnp.float32),
    }


def fuse_params(params, *, heads):
    """One-time host-side parameter prep:
      * fused (E, 3E) QKV projection with 1/sqrt(head_dim) folded into Q cols,
      * residual identity folded into the dense weight (w1' = I + w1)."""
    E = params["wq"].shape[0]
    scale = 1.0 / math.sqrt(E // heads)
    wqkv = jnp.concatenate(
        [params["wq"] * scale, params["wk"], params["wv"]], axis=1)
    bqkv = jnp.concatenate(
        [params["bq"] * scale, params["bk"], params["bv"]], axis=1)
    w1p = jnp.eye(E, dtype=params["w1"].dtype) + params["w1"]
    return {"wqkv": wqkv, "bqkv": bqkv, "w1p": w1p, "b1": params["b1"],
            "gamma": params["gamma"], "beta": params["beta"]}


def dpsr_reference(x, params, *, heads):
    """Pure-JAX reference (same math, no Pallas) for sanity checking."""
    B, S, E = x.shape
    Dh = E // heads
    q = x @ params["wq"] + params["bq"]
    k = x @ params["wk"] + params["bk"]
    v = x @ params["wv"] + params["bv"]

    def split(t):
        return t.reshape(B, S, heads, Dh).transpose(0, 2, 1, 3)

    qh, kh, vh = split(q), split(k), split(v)
    scores = jnp.einsum("bhsd,bhtd->bhst", qh, kh) / math.sqrt(Dh)
    probs = jax.nn.softmax(scores, axis=-1)
    ctx = jnp.einsum("bhst,bhtd->bhsd", probs, vh)
    ctx = ctx.transpose(0, 2, 1, 3).reshape(B, S, E)
    out = ctx + (ctx @ params["w1"] + params["b1"])
    mean = out.mean(-1, keepdims=True)
    var = ((out - mean) ** 2).mean(-1, keepdims=True)
    return (out - mean) / jnp.sqrt(var + 1e-5) * params["gamma"] + params["beta"]


if __name__ == "__main__":
    B, S, E, H = 2, 8, 32, 4   # emb_size=32, head=4, dropout inactive (eval semantics)
    key = jax.random.PRNGKey(0)
    kx, kp = jax.random.split(key)
    x = jax.random.normal(kx, (B, S, E), jnp.float32)
    params = init_params(kp, E)
    fused = fuse_params(params, heads=H)

    out = dpsr_forward(x, fused, heads=H)
    out = jax.block_until_ready(out)

    ref = dpsr_reference(x, params, heads=H)
    assert out.shape == (B, S, E)
    # Tolerance covers the EUP approximate-reciprocal softmax divide.
    assert jnp.allclose(out, ref, atol=5e-3, rtol=5e-3), "mismatch vs reference"
    print("KERNEL_OK")
</pallas_src>

<mosaic_0001>
module attributes {stable_mosaic.version = 11 : i64} {
  func.func @_dpsr_kernel(%arg0: i32, %arg1: memref<1x16x32xf32, #tpu.memory_space<vmem>>, %arg2: memref<64x64xf32, #tpu.memory_space<vmem>>, %arg3: memref<32x96xf32, #tpu.memory_space<vmem>>, %arg4: memref<1x96xf32, #tpu.memory_space<vmem>>, %arg5: memref<32x32xf32, #tpu.memory_space<vmem>>, %arg6: memref<1x32xf32, #tpu.memory_space<vmem>>, %arg7: memref<1x32xf32, #tpu.memory_space<vmem>>, %arg8: memref<1x32xf32, #tpu.memory_space<vmem>>, %arg9: memref<1x16x32xf32, #tpu.memory_space<vmem>>) attributes {dimension_semantics = [#tpu.dimension_semantics<parallel>], iteration_bounds = array<i64: 1>, scalar_prefetch = 0 : i64, scratch_operands = 0 : i64, tpu.core_type = #tpu.core_type<tc>, window_params = [{transform_indices = @transform_0, window_bounds = array<i64: 1, 16, 32>}, {pipeline_mode = #tpu.pipeline_mode<synchronous>, transform_indices = @transform_1, window_bounds = array<i64: 64, 64>}, {pipeline_mode = #tpu.pipeline_mode<synchronous>, transform_indices = @transform_2, window_bounds = array<i64: 32, 96>}, {pipeline_mode = #tpu.pipeline_mode<synchronous>, transform_indices = @transform_3, window_bounds = array<i64: 1, 96>}, {pipeline_mode = #tpu.pipeline_mode<synchronous>, transform_indices = @transform_4, window_bounds = array<i64: 32, 32>}, {pipeline_mode = #tpu.pipeline_mode<synchronous>, transform_indices = @transform_5, window_bounds = array<i64: 1, 32>}, {pipeline_mode = #tpu.pipeline_mode<synchronous>, transform_indices = @transform_6, window_bounds = array<i64: 1, 32>}, {pipeline_mode = #tpu.pipeline_mode<synchronous>, transform_indices = @transform_7, window_bounds = array<i64: 1, 32>}, {transform_indices = @transform_8, window_bounds = array<i64: 1, 16, 32>}]} {
    %c0 = arith.constant 0 : index
    %c0_0 = arith.constant 0 : index
    %c0_1 = arith.constant 0 : index
    %0 = vector.load %arg1[%c0, %c0_0, %c0_1] : memref<1x16x32xf32, #tpu.memory_space<vmem>>, vector<1x16x32xf32>
    %1 = vector.shape_cast %0 : vector<1x16x32xf32> to vector<16x32xf32>
    %c0_2 = arith.constant 0 : index
    %c0_3 = arith.constant 0 : index
    %2 = vector.load %arg3[%c0_2, %c0_3] : memref<32x96xf32, #tpu.memory_space<vmem>>, vector<32x96xf32>
    %cst = arith.constant dense<0.000000e+00> : vector<16x96xf32>
    %3 = tpu.matmul %1, %2, %cst {dimension_numbers = #tpu.dot_dimension_numbers<[1], [0], [0], [1], [0, 0, 1, 1], [], []>} : vector<16x32xf32>, vector<32x96xf32>, vector<16x96xf32> -> vector<16x96xf32>
    %c0_4 = arith.constant 0 : index
    %c0_5 = arith.constant 0 : index
    %4 = vector.load %arg4[%c0_4, %c0_5] : memref<1x96xf32, #tpu.memory_space<vmem>>, vector<1x96xf32>
    %5 = vector.broadcast %4 : vector<1x96xf32> to vector<16x96xf32>
    %6 = arith.addf %3, %5 : vector<16x96xf32>
    %7 = vector.extract_strided_slice %6 {offsets = [0, 0], sizes = [8, 8], strides = [1, 1]} : vector<16x96xf32> to vector<8x8xf32>
    %8 = vector.extract_strided_slice %6 {offsets = [0, 8], sizes = [8, 8], strides = [1, 1]} : vector<16x96xf32> to vector<8x8xf32>
    %9 = vector.extract_strided_slice %6 {offsets = [0, 16], sizes = [8, 8], strides = [1, 1]} : vector<16x96xf32> to vector<8x8xf32>
    %10 = vector.extract_strided_slice %6 {offsets = [0, 24], sizes = [8, 8], strides = [1, 1]} : vector<16x96xf32> to vector<8x8xf32>
    %11 = vector.extract_strided_slice %6 {offsets = [8, 0], sizes = [8, 8], strides = [1, 1]} : vector<16x96xf32> to vector<8x8xf32>
    %12 = vector.extract_strided_slice %6 {offsets = [8, 8], sizes = [8, 8], strides = [1, 1]} : vector<16x96xf32> to vector<8x8xf32>
    %13 = vector.extract_strided_slice %6 {offsets = [8, 16], sizes = [8, 8], strides = [1, 1]} : vector<16x96xf32> to vector<8x8xf32>
    %14 = vector.extract_strided_slice %6 {offsets = [8, 24], sizes = [8, 8], strides = [1, 1]} : vector<16x96xf32> to vector<8x8xf32>
    %15 = tpu.concatenate %7, %8, %9, %10, %11, %12, %13, %14 in 0 : vector<8x8xf32>, vector<8x8xf32>, vector<8x8xf32>, vector<8x8xf32>, vector<8x8xf32>, vector<8x8xf32>, vector<8x8xf32>, vector<8x8xf32> -> vector<64x8xf32>
    %16 = vector.extract_strided_slice %6 {offsets = [0, 32], sizes = [8, 8], strides = [1, 1]} : vector<16x96xf32> to vector<8x8xf32>
    %17 = vector.extract_strided_slice %6 {offsets = [0, 40], sizes = [8, 8], strides = [1, 1]} : vector<16x96xf32> to vector<8x8xf32>
    %18 = vector.extract_strided_slice %6 {offsets = [0, 48], sizes = [8, 8], strides = [1, 1]} : vector<16x96xf32> to vector<8x8xf32>
    %19 = vector.extract_strided_slice %6 {offsets = [0, 56], sizes = [8, 8], strides = [1, 1]} : vector<16x96xf32> to vector<8x8xf32>
    %20 = vector.extract_strided_slice %6 {offsets = [8, 32], sizes = [8, 8], strides = [1, 1]} : vector<16x96xf32> to vector<8x8xf32>
    %21 = vector.extract_strided_slice %6 {offsets = [8, 40], sizes = [8, 8], strides = [1, 1]} : vector<16x96xf32> to vector<8x8xf32>
    %22 = vector.extract_strided_slice %6 {offsets = [8, 48], sizes = [8, 8], strides = [1, 1]} : vector<16x96xf32> to vector<8x8xf32>
    %23 = vector.extract_strided_slice %6 {offsets = [8, 56], sizes = [8, 8], strides = [1, 1]} : vector<16x96xf32> to vector<8x8xf32>
    %24 = tpu.concatenate %16, %17, %18, %19, %20, %21, %22, %23 in 0 : vector<8x8xf32>, vector<8x8xf32>, vector<8x8xf32>, vector<8x8xf32>, vector<8x8xf32>, vector<8x8xf32>, vector<8x8xf32>, vector<8x8xf32> -> vector<64x8xf32>
    %25 = vector.extract_strided_slice %6 {offsets = [0, 64], sizes = [8, 8], strides = [1, 1]} : vector<16x96xf32> to vector<8x8xf32>
    %26 = vector.extract_strided_slice %6 {offsets = [0, 72], sizes = [8, 8], strides = [1, 1]} : vector<16x96xf32> to vector<8x8xf32>
    %27 = vector.extract_strided_slice %6 {offsets = [0, 80], sizes = [8, 8], strides = [1, 1]} : vector<16x96xf32> to vector<8x8xf32>
    %28 = vector.extract_strided_slice %6 {offsets = [0, 88], sizes = [8, 8], strides = [1, 1]} : vector<16x96xf32> to vector<8x8xf32>
    %29 = vector.extract_strided_slice %6 {offsets = [8, 64], sizes = [8, 8], strides = [1, 1]} : vector<16x96xf32> to vector<8x8xf32>
    %30 = vector.extract_strided_slice %6 {offsets = [8, 72], sizes = [8, 8], strides = [1, 1]} : vector<16x96xf32> to vector<8x8xf32>
    %31 = vector.extract_strided_slice %6 {offsets = [8, 80], sizes = [8, 8], strides = [1, 1]} : vector<16x96xf32> to vector<8x8xf32>
    %32 = vector.extract_strided_slice %6 {offsets = [8, 88], sizes = [8, 8], strides = [1, 1]} : vector<16x96xf32> to vector<8x8xf32>
    %33 = tpu.concatenate %25, %26, %27, %28, %29, %30, %31, %32 in 0 : vector<8x8xf32>, vector<8x8xf32>, vector<8x8xf32>, vector<8x8xf32>, vector<8x8xf32>, vector<8x8xf32>, vector<8x8xf32>, vector<8x8xf32> -> vector<64x8xf32>
    %cst_6 = arith.constant dense<0.000000e+00> : vector<64x64xf32>
    %34 = tpu.matmul %15, %24, %cst_6 {dimension_numbers = #tpu.dot_dimension_numbers<[1], [1], [0], [0], [0, 0, 1, 0], [], []>} : vector<64x8xf32>, vector<64x8xf32>, vector<64x64xf32> -> vector<64x64xf32>
    %c0_7 = arith.constant 0 : index
    %c0_8 = arith.constant 0 : index
    %35 = vector.load %arg2[%c0_7, %c0_8] : memref<64x64xf32, #tpu.memory_space<vmem>>, vector<64x64xf32>
    %36 = arith.addf %34, %35 : vector<64x64xf32>
    %cst_9 = arith.constant dense<0xFF800000> : vector<64xf32>
    %37 = vector.multi_reduction <maximumf>, %36, %cst_9 [1] : vector<64x64xf32> to vector<64xf32>
    %38 = vector.shape_cast %37 : vector<64xf32> to vector<64x1xf32>
    %39 = vector.broadcast %38 : vector<64x1xf32> to vector<64x64xf32>
    %40 = arith.subf %36, %39 : vector<64x64xf32>
    %41 = math.exp %40 : vector<64x64xf32>
    %cst_10 = arith.constant dense<0.000000e+00> : vector<64xf32>
    %42 = vector.multi_reduction <add>, %41, %cst_10 [1] : vector<64x64xf32> to vector<64xf32>
    %43 = vector.shape_cast %42 : vector<64xf32> to vector<64x1xf32>
    %44 = tpu.reciprocal %43 {approx = true} : vector<64x1xf32> -> vector<64x1xf32>
    %45 = vector.broadcast %44 : vector<64x1xf32> to vector<64x64xf32>
    %46 = arith.mulf %41, %45 : vector<64x64xf32>
    %cst_11 = arith.constant dense<0.000000e+00> : vector<64x8xf32>
    %47 = tpu.matmul %46, %33, %cst_11 {dimension_numbers = #tpu.dot_dimension_numbers<[1], [0], [0], [1], [0, 0, 1, 1], [], []>} : vector<64x64xf32>, vector<64x8xf32>, vector<64x8xf32> -> vector<64x8xf32>
    %48 = vector.extract_strided_slice %47 {offsets = [0, 0], sizes = [8, 8], strides = [1, 1]} : vector<64x8xf32> to vector<8x8xf32>
    %49 = vector.extract_strided_slice %47 {offsets = [8, 0], sizes = [8, 8], strides = [1, 1]} : vector<64x8xf32> to vector<8x8xf32>
    %50 = vector.extract_strided_slice %47 {offsets = [16, 0], sizes = [8, 8], strides = [1, 1]} : vector<64x8xf32> to vector<8x8xf32>
    %51 = vector.extract_strided_slice %47 {offsets = [24, 0], sizes = [8, 8], strides = [1, 1]} : vector<64x8xf32> to vector<8x8xf32>
    %52 = tpu.concatenate %48, %49, %50, %51 in 1 : vector<8x8xf32>, vector<8x8xf32>, vector<8x8xf32>, vector<8x8xf32> -> vector<8x32xf32>
    %53 = vector.extract_strided_slice %47 {offsets = [32, 0], sizes = [8, 8], strides = [1, 1]} : vector<64x8xf32> to vector<8x8xf32>
    %54 = vector.extract_strided_slice %47 {offsets = [40, 0], sizes = [8, 8], strides = [1, 1]} : vector<64x8xf32> to vector<8x8xf32>
    %55 = vector.extract_strided_slice %47 {offsets = [48, 0], sizes = [8, 8], strides = [1, 1]} : vector<64x8xf32> to vector<8x8xf32>
    %56 = vector.extract_strided_slice %47 {offsets = [56, 0], sizes = [8, 8], strides = [1, 1]} : vector<64x8xf32> to vector<8x8xf32>
    %57 = tpu.concatenate %53, %54, %55, %56 in 1 : vector<8x8xf32>, vector<8x8xf32>, vector<8x8xf32>, vector<8x8xf32> -> vector<8x32xf32>
    %58 = tpu.concatenate %52, %57 in 0 : vector<8x32xf32>, vector<8x32xf32> -> vector<16x32xf32>
    %c0_12 = arith.constant 0 : index
    %c0_13 = arith.constant 0 : index
    %59 = vector.load %arg5[%c0_12, %c0_13] : memref<32x32xf32, #tpu.memory_space<vmem>>, vector<32x32xf32>
    %cst_14 = arith.constant dense<0.000000e+00> : vector<16x32xf32>
    %60 = tpu.matmul %58, %59, %cst_14 {dimension_numbers = #tpu.dot_dimension_numbers<[1], [0], [0], [1], [0, 0, 1, 1], [], []>} : vector<16x32xf32>, vector<32x32xf32>, vector<16x32xf32> -> vector<16x32xf32>
    %c0_15 = arith.constant 0 : index
    %c0_16 = arith.constant 0 : index
    %61 = vector.load %arg6[%c0_15, %c0_16] : memref<1x32xf32, #tpu.memory_space<vmem>>, vector<1x32xf32>
    %62 = vector.broadcast %61 : vector<1x32xf32> to vector<16x32xf32>
    %63 = arith.addf %60, %62 : vector<16x32xf32>
    %cst_17 = arith.constant dense<0.000000e+00> : vector<16xf32>
    %64 = vector.multi_reduction <add>, %63, %cst_17 [1] : vector<16x32xf32> to vector<16xf32>
    %65 = vector.shape_cast %64 : vector<16xf32> to vector<16x1xf32>
    %cst_18 = arith.constant 3.200000e+01 : f32
    %66 = vector.broadcast %cst_18 : f32 to vector<16x1xf32>
    %67 = arith.divf %65, %66 : vector<16x1xf32>
    %68 = arith.mulf %63, %63 : vector<16x32xf32>
    %cst_19 = arith.constant dense<0.000000e+00> : vector<16xf32>
    %69 = vector.multi_reduction <add>, %68, %cst_19 [1] : vector<16x32xf32> to vector<16xf32>
    %70 = vector.shape_cast %69 : vector<16xf32> to vector<16x1xf32>
    %cst_20 = arith.constant 3.200000e+01 : f32
    %71 = vector.broadcast %cst_20 : f32 to vector<16x1xf32>
    %72 = arith.divf %70, %71 : vector<16x1xf32>
    %73 = arith.mulf %67, %67 : vector<16x1xf32>
    %74 = arith.subf %72, %73 : vector<16x1xf32>
    %75 = vector.broadcast %67 : vector<16x1xf32> to vector<16x32xf32>
    %76 = arith.subf %63, %75 : vector<16x32xf32>
    %cst_21 = arith.constant 9.99999974E-6 : f32
    %77 = vector.broadcast %cst_21 : f32 to vector<16x1xf32>
    %78 = arith.addf %74, %77 : vector<16x1xf32>
    %79 = math.rsqrt %78 : vector<16x1xf32>
    %80 = vector.broadcast %79 : vector<16x1xf32> to vector<16x32xf32>
    %81 = arith.mulf %76, %80 : vector<16x32xf32>
    %c0_22 = arith.constant 0 : index
    %c0_23 = arith.constant 0 : index
    %82 = vector.load %arg7[%c0_22, %c0_23] : memref<1x32xf32, #tpu.memory_space<vmem>>, vector<1x32xf32>
    %83 = vector.broadcast %82 : vector<1x32xf32> to vector<16x32xf32>
    %84 = arith.mulf %81, %83 : vector<16x32xf32>
    %c0_24 = arith.constant 0 : index
    %c0_25 = arith.constant 0 : index
    %85 = vector.load %arg8[%c0_24, %c0_25] : memref<1x32xf32, #tpu.memory_space<vmem>>, vector<1x32xf32>
    %86 = vector.broadcast %85 : vector<1x32xf32> to vector<16x32xf32>
    %87 = arith.addf %84, %86 : vector<16x32xf32>
    %c0_26 = arith.constant 0 : index
    %c0_27 = arith.constant 0 : index
    %c0_28 = arith.constant 0 : index
    %88 = vector.load %arg9[%c0_26, %c0_27, %c0_28] : memref<1x16x32xf32, #tpu.memory_space<vmem>>, vector<1x16x32xf32>
    %89 = vector.shape_cast %88 : vector<1x16x32xf32> to vector<16x32xf32>
    %90 = vector.shape_cast %87 : vector<16x32xf32> to vector<1x16x32xf32>
    tpu.vector_store %arg9[%c0_26, %c0_27, %c0_28], %90 {strides = array<i32>} : memref<1x16x32xf32, #tpu.memory_space<vmem>>, vector<1x16x32xf32>,
    return
  }
  func.func @transform_0(%arg0: i32) -> (i32, i32, i32) {
    %c0_i32 = arith.constant 0 : i32
    %c0_i32_0 = arith.constant 0 : i32
    %c0_i32_1 = arith.constant 0 : i32
    return %arg0, %c0_i32, %c0_i32_0 : i32, i32, i32
  }
  func.func @transform_1(%arg0: i32) -> (i32, i32) {
    %c0_i32 = arith.constant 0 : i32
    %c0_i32_0 = arith.constant 0 : i32
    %c0_i32_1 = arith.constant 0 : i32
    return %c0_i32, %c0_i32_0 : i32, i32
  }
  func.func @transform_2(%arg0: i32) -> (i32, i32) {
    %c0_i32 = arith.constant 0 : i32
    %c0_i32_0 = arith.constant 0 : i32
    %c0_i32_1 = arith.constant 0 : i32
    return %c0_i32, %c0_i32_0 : i32, i32
  }
  func.func @transform_3(%arg0: i32) -> (i32, i32) {
    %c0_i32 = arith.constant 0 : i32
    %c0_i32_0 = arith.constant 0 : i32
    %c0_i32_1 = arith.constant 0 : i32
    return %c0_i32, %c0_i32_0 : i32, i32
  }
  func.func @transform_4(%arg0: i32) -> (i32, i32) {
    %c0_i32 = arith.constant 0 : i32
    %c0_i32_0 = arith.constant 0 : i32
    %c0_i32_1 = arith.constant 0 : i32
    return %c0_i32, %c0_i32_0 : i32, i32
  }
  func.func @transform_5(%arg0: i32) -> (i32, i32) {
    %c0_i32 = arith.constant 0 : i32
    %c0_i32_0 = arith.constant 0 : i32
    %c0_i32_1 = arith.constant 0 : i32
    return %c0_i32, %c0_i32_0 : i32, i32
  }
  func.func @transform_6(%arg0: i32) -> (i32, i32) {
    %c0_i32 = arith.constant 0 : i32
    %c0_i32_0 = arith.constant 0 : i32
    %c0_i32_1 = arith.constant 0 : i32
    return %c0_i32, %c0_i32_0 : i32, i32
  }
  func.func @transform_7(%arg0: i32) -> (i32, i32) {
    %c0_i32 = arith.constant 0 : i32
    %c0_i32_0 = arith.constant 0 : i32
    %c0_i32_1 = arith.constant 0 : i32
    return %c0_i32, %c0_i32_0 : i32, i32
  }
  func.func @transform_8(%arg0: i32) -> (i32, i32, i32) {
    %c0_i32 = arith.constant 0 : i32
    %c0_i32_0 = arith.constant 0 : i32
    %c0_i32_1 = arith.constant 0 : i32
    return %arg0, %c0_i32, %c0_i32_0 : i32, i32, i32
  }
}

module attributes {stable_mosaic.version = 11 : i64} {
  func.func @_dpsr_kernel(%arg0: i32, %arg1: memref<1x16x32xf32, #tpu.memory_space<vmem>>, %arg2: memref<64x64xf32, #tpu.memory_space<vmem>>, %arg3: memref<32x96xf32, #tpu.memory_space<vmem>>, %arg4: memref<1x96xf32, #tpu.memory_space<vmem>>, %arg5: memref<32x32xf32, #tpu.memory_space<vmem>>, %arg6: memref<1x32xf32, #tpu.memory_space<vmem>>, %arg7: memref<1x32xf32, #tpu.memory_space<vmem>>, %arg8: memref<1x32xf32, #tpu.memory_space<vmem>>, %arg9: memref<1x16x32xf32, #tpu.memory_space<vmem>>) attributes {dimension_semantics = [#tpu.dimension_semantics<parallel>], iteration_bounds = array<i64: 1>, scalar_prefetch = 0 : i64, scratch_operands = 0 : i64, tpu.core_type = #tpu.core_type<tc>, window_params = [{transform_indices = @transform_0, window_bounds = array<i64: 1, 16, 32>}, {pipeline_mode = #tpu.pipeline_mode<synchronous>, transform_indices = @transform_1, window_bounds = array<i64: 64, 64>}, {pipeline_mode = #tpu.pipeline_mode<synchronous>, transform_indices = @transform_2, window_bounds = array<i64: 32, 96>}, {pipeline_mode = #tpu.pipeline_mode<synchronous>, transform_indices = @transform_3, window_bounds = array<i64: 1, 96>}, {pipeline_mode = #tpu.pipeline_mode<synchronous>, transform_indices = @transform_4, window_bounds = array<i64: 32, 32>}, {pipeline_mode = #tpu.pipeline_mode<synchronous>, transform_indices = @transform_5, window_bounds = array<i64: 1, 32>}, {pipeline_mode = #tpu.pipeline_mode<synchronous>, transform_indices = @transform_6, window_bounds = array<i64: 1, 32>}, {pipeline_mode = #tpu.pipeline_mode<synchronous>, transform_indices = @transform_7, window_bounds = array<i64: 1, 32>}, {transform_indices = @transform_8, window_bounds = array<i64: 1, 16, 32>}]} {
    %c0 = arith.constant 0 : index
    %c0_0 = arith.constant 0 : index
    %c0_1 = arith.constant 0 : index
    %0 = vector.load %arg1[%c0, %c0_0, %c0_1] : memref<1x16x32xf32, #tpu.memory_space<vmem>>, vector<1x16x32xf32>
    %1 = vector.shape_cast %0 : vector<1x16x32xf32> to vector<16x32xf32>
    %c0_2 = arith.constant 0 : index
    %c0_3 = arith.constant 0 : index
    %2 = vector.load %arg3[%c0_2, %c0_3] : memref<32x96xf32, #tpu.memory_space<vmem>>, vector<32x96xf32>
    %cst = arith.constant dense<0.000000e+00> : vector<16x96xf32>
    %3 = tpu.matmul %1, %2, %cst {dimension_numbers = #tpu.dot_dimension_numbers<[1], [0], [0], [1], [0, 0, 1, 1], [], []>} : vector<16x32xf32>, vector<32x96xf32>, vector<16x96xf32> -> vector<16x96xf32>
    %c0_4 = arith.constant 0 : index
    %c0_5 = arith.constant 0 : index
    %4 = vector.load %arg4[%c0_4, %c0_5] : memref<1x96xf32, #tpu.memory_space<vmem>>, vector<1x96xf32>
    %5 = vector.broadcast %4 : vector<1x96xf32> to vector<16x96xf32>
    %6 = arith.addf %3, %5 : vector<16x96xf32>
    %7 = vector.extract_strided_slice %6 {offsets = [0, 0], sizes = [8, 8], strides = [1, 1]} : vector<16x96xf32> to vector<8x8xf32>
    %8 = vector.extract_strided_slice %6 {offsets = [0, 8], sizes = [8, 8], strides = [1, 1]} : vector<16x96xf32> to vector<8x8xf32>
    %9 = vector.extract_strided_slice %6 {offsets = [0, 16], sizes = [8, 8], strides = [1, 1]} : vector<16x96xf32> to vector<8x8xf32>
    %10 = vector.extract_strided_slice %6 {offsets = [0, 24], sizes = [8, 8], strides = [1, 1]} : vector<16x96xf32> to vector<8x8xf32>
    %11 = vector.extract_strided_slice %6 {offsets = [8, 0], sizes = [8, 8], strides = [1, 1]} : vector<16x96xf32> to vector<8x8xf32>
    %12 = vector.extract_strided_slice %6 {offsets = [8, 8], sizes = [8, 8], strides = [1, 1]} : vector<16x96xf32> to vector<8x8xf32>
    %13 = vector.extract_strided_slice %6 {offsets = [8, 16], sizes = [8, 8], strides = [1, 1]} : vector<16x96xf32> to vector<8x8xf32>
    %14 = vector.extract_strided_slice %6 {offsets = [8, 24], sizes = [8, 8], strides = [1, 1]} : vector<16x96xf32> to vector<8x8xf32>
    %15 = tpu.concatenate %7, %8, %9, %10, %11, %12, %13, %14 in 0 : vector<8x8xf32>, vector<8x8xf32>, vector<8x8xf32>, vector<8x8xf32>, vector<8x8xf32>, vector<8x8xf32>, vector<8x8xf32>, vector<8x8xf32> -> vector<64x8xf32>
    %16 = vector.extract_strided_slice %6 {offsets = [0, 32], sizes = [8, 8], strides = [1, 1]} : vector<16x96xf32> to vector<8x8xf32>
    %17 = vector.extract_strided_slice %6 {offsets = [0, 40], sizes = [8, 8], strides = [1, 1]} : vector<16x96xf32> to vector<8x8xf32>
    %18 = vector.extract_strided_slice %6 {offsets = [0, 48], sizes = [8, 8], strides = [1, 1]} : vector<16x96xf32> to vector<8x8xf32>
    %19 = vector.extract_strided_slice %6 {offsets = [0, 56], sizes = [8, 8], strides = [1, 1]} : vector<16x96xf32> to vector<8x8xf32>
    %20 = vector.extract_strided_slice %6 {offsets = [8, 32], sizes = [8, 8], strides = [1, 1]} : vector<16x96xf32> to vector<8x8xf32>
    %21 = vector.extract_strided_slice %6 {offsets = [8, 40], sizes = [8, 8], strides = [1, 1]} : vector<16x96xf32> to vector<8x8xf32>
    %22 = vector.extract_strided_slice %6 {offsets = [8, 48], sizes = [8, 8], strides = [1, 1]} : vector<16x96xf32> to vector<8x8xf32>
    %23 = vector.extract_strided_slice %6 {offsets = [8, 56], sizes = [8, 8], strides = [1, 1]} : vector<16x96xf32> to vector<8x8xf32>
    %24 = tpu.concatenate %16, %17, %18, %19, %20, %21, %22, %23 in 0 : vector<8x8xf32>, vector<8x8xf32>, vector<8x8xf32>, vector<8x8xf32>, vector<8x8xf32>, vector<8x8xf32>, vector<8x8xf32>, vector<8x8xf32> -> vector<64x8xf32>
    %25 = vector.extract_strided_slice %6 {offsets = [0, 64], sizes = [8, 8], strides = [1, 1]} : vector<16x96xf32> to vector<8x8xf32>
    %26 = vector.extract_strided_slice %6 {offsets = [0, 72], sizes = [8, 8], strides = [1, 1]} : vector<16x96xf32> to vector<8x8xf32>
    %27 = vector.extract_strided_slice %6 {offsets = [0, 80], sizes = [8, 8], strides = [1, 1]} : vector<16x96xf32> to vector<8x8xf32>
    %28 = vector.extract_strided_slice %6 {offsets = [0, 88], sizes = [8, 8], strides = [1, 1]} : vector<16x96xf32> to vector<8x8xf32>
    %29 = vector.extract_strided_slice %6 {offsets = [8, 64], sizes = [8, 8], strides = [1, 1]} : vector<16x96xf32> to vector<8x8xf32>
    %30 = vector.extract_strided_slice %6 {offsets = [8, 72], sizes = [8, 8], strides = [1, 1]} : vector<16x96xf32> to vector<8x8xf32>
    %31 = vector.extract_strided_slice %6 {offsets = [8, 80], sizes = [8, 8], strides = [1, 1]} : vector<16x96xf32> to vector<8x8xf32>
    %32 = vector.extract_strided_slice %6 {offsets = [8, 88], sizes = [8, 8], strides = [1, 1]} : vector<16x96xf32> to vector<8x8xf32>
    %33 = tpu.concatenate %25, %26, %27, %28, %29, %30, %31, %32 in 0 : vector<8x8xf32>, vector<8x8xf32>, vector<8x8xf32>, vector<8x8xf32>, vector<8x8xf32>, vector<8x8xf32>, vector<8x8xf32>, vector<8x8xf32> -> vector<64x8xf32>
    %cst_6 = arith.constant dense<0.000000e+00> : vector<64x64xf32>
    %34 = tpu.matmul %15, %24, %cst_6 {dimension_numbers = #tpu.dot_dimension_numbers<[1], [1], [0], [0], [0, 0, 1, 0], [], []>} : vector<64x8xf32>, vector<64x8xf32>, vector<64x64xf32> -> vector<64x64xf32>
    %c0_7 = arith.constant 0 : index
    %c0_8 = arith.constant 0 : index
    %35 = vector.load %arg2[%c0_7, %c0_8] : memref<64x64xf32, #tpu.memory_space<vmem>>, vector<64x64xf32>
    %36 = arith.addf %34, %35 : vector<64x64xf32>
    %cst_9 = arith.constant dense<0xFF800000> : vector<64xf32>
    %37 = vector.multi_reduction <maximumf>, %36, %cst_9 [1] : vector<64x64xf32> to vector<64xf32>
    %38 = vector.shape_cast %37 : vector<64xf32> to vector<64x1xf32>
    %39 = vector.broadcast %38 : vector<64x1xf32> to vector<64x64xf32>
    %40 = arith.subf %36, %39 : vector<64x64xf32>
    %41 = math.exp %40 : vector<64x64xf32>
    %cst_10 = arith.constant dense<0.000000e+00> : vector<64xf32>
    %42 = vector.multi_reduction <add>, %41, %cst_10 [1] : vector<64x64xf32> to vector<64xf32>
    %43 = vector.shape_cast %42 : vector<64xf32> to vector<64x1xf32>
    %44 = tpu.reciprocal %43 {approx = true} : vector<64x1xf32> -> vector<64x1xf32>
    %45 = vector.broadcast %44 : vector<64x1xf32> to vector<64x64xf32>
    %46 = arith.mulf %41, %45 : vector<64x64xf32>
    %cst_11 = arith.constant dense<0.000000e+00> : vector<64x8xf32>
    %47 = tpu.matmul %46, %33, %cst_11 {dimension_numbers = #tpu.dot_dimension_numbers<[1], [0], [0], [1], [0, 0, 1, 1], [], []>} : vector<64x64xf32>, vector<64x8xf32>, vector<64x8xf32> -> vector<64x8xf32>
    %48 = vector.extract_strided_slice %47 {offsets = [0, 0], sizes = [8, 8], strides = [1, 1]} : vector<64x8xf32> to vector<8x8xf32>
    %49 = vector.extract_strided_slice %47 {offsets = [8, 0], sizes = [8, 8], strides = [1, 1]} : vector<64x8xf32> to vector<8x8xf32>
    %50 = vector.extract_strided_slice %47 {offsets = [16, 0], sizes = [8, 8], strides = [1, 1]} : vector<64x8xf32> to vector<8x8xf32>
    %51 = vector.extract_strided_slice %47 {offsets = [24, 0], sizes = [8, 8], strides = [1, 1]} : vector<64x8xf32> to vector<8x8xf32>
    %52 = tpu.concatenate %48, %49, %50, %51 in 1 : vector<8x8xf32>, vector<8x8xf32>, vector<8x8xf32>, vector<8x8xf32> -> vector<8x32xf32>
    %53 = vector.extract_strided_slice %47 {offsets = [32, 0], sizes = [8, 8], strides = [1, 1]} : vector<64x8xf32> to vector<8x8xf32>
    %54 = vector.extract_strided_slice %47 {offsets = [40, 0], sizes = [8, 8], strides = [1, 1]} : vector<64x8xf32> to vector<8x8xf32>
    %55 = vector.extract_strided_slice %47 {offsets = [48, 0], sizes = [8, 8], strides = [1, 1]} : vector<64x8xf32> to vector<8x8xf32>
    %56 = vector.extract_strided_slice %47 {offsets = [56, 0], sizes = [8, 8], strides = [1, 1]} : vector<64x8xf32> to vector<8x8xf32>
    %57 = tpu.concatenate %53, %54, %55, %56 in 1 : vector<8x8xf32>, vector<8x8xf32>, vector<8x8xf32>, vector<8x8xf32> -> vector<8x32xf32>
    %58 = tpu.concatenate %52, %57 in 0 : vector<8x32xf32>, vector<8x32xf32> -> vector<16x32xf32>
    %c0_12 = arith.constant 0 : index
    %c0_13 = arith.constant 0 : index
    %59 = vector.load %arg5[%c0_12, %c0_13] : memref<32x32xf32, #tpu.memory_space<vmem>>, vector<32x32xf32>
    %cst_14 = arith.constant dense<0.000000e+00> : vector<16x32xf32>
    %60 = tpu.matmul %58, %59, %cst_14 {dimension_numbers = #tpu.dot_dimension_numbers<[1], [0], [0], [1], [0, 0, 1, 1], [], []>} : vector<16x32xf32>, vector<32x32xf32>, vector<16x32xf32> -> vector<16x32xf32>
    %c0_15 = arith.constant 0 : index
    %c0_16 = arith.constant 0 : index
    %61 = vector.load %arg6[%c0_15, %c0_16] : memref<1x32xf32, #tpu.memory_space<vmem>>, vector<1x32xf32>
    %62 = vector.broadcast %61 : vector<1x32xf32> to vector<16x32xf32>
    %63 = arith.addf %60, %62 : vector<16x32xf32>
    %cst_17 = arith.constant dense<0.000000e+00> : vector<16xf32>
    %64 = vector.multi_reduction <add>, %63, %cst_17 [1] : vector<16x32xf32> to vector<16xf32>
    %65 = vector.shape_cast %64 : vector<16xf32> to vector<16x1xf32>
    %cst_18 = arith.constant 3.200000e+01 : f32
    %66 = vector.broadcast %cst_18 : f32 to vector<16x1xf32>
    %67 = arith.divf %65, %66 : vector<16x1xf32>
    %68 = arith.mulf %63, %63 : vector<16x32xf32>
    %cst_19 = arith.constant dense<0.000000e+00> : vector<16xf32>
    %69 = vector.multi_reduction <add>, %68, %cst_19 [1] : vector<16x32xf32> to vector<16xf32>
    %70 = vector.shape_cast %69 : vector<16xf32> to vector<16x1xf32>
    %cst_20 = arith.constant 3.200000e+01 : f32
    %71 = vector.broadcast %cst_20 : f32 to vector<16x1xf32>
    %72 = arith.divf %70, %71 : vector<16x1xf32>
    %73 = arith.mulf %67, %67 : vector<16x1xf32>
    %74 = arith.subf %72, %73 : vector<16x1xf32>
    %75 = vector.broadcast %67 : vector<16x1xf32> to vector<16x32xf32>
    %76 = arith.subf %63, %75 : vector<16x32xf32>
    %cst_21 = arith.constant 9.99999974E-6 : f32
    %77 = vector.broadcast %cst_21 : f32 to vector<16x1xf32>
    %78 = arith.addf %74, %77 : vector<16x1xf32>
    %79 = math.rsqrt %78 : vector<16x1xf32>
    %80 = vector.broadcast %79 : vector<16x1xf32> to vector<16x32xf32>
    %81 = arith.mulf %76, %80 : vector<16x32xf32>
    %c0_22 = arith.constant 0 : index
    %c0_23 = arith.constant 0 : index
    %82 = vector.load %arg7[%c0_22, %c0_23] : memref<1x32xf32, #tpu.memory_space<vmem>>, vector<1x32xf32>
    %83 = vector.broadcast %82 : vector<1x32xf32> to vector<16x32xf32>
    %84 = arith.mulf %81, %83 : vector<16x32xf32>
    %c0_24 = arith.constant 0 : index
    %c0_25 = arith.constant 0 : index
    %85 = vector.load %arg8[%c0_24, %c0_25] : memref<1x32xf32, #tpu.memory_space<vmem>>, vector<1x32xf32>
    %86 = vector.broadcast %85 : vector<1x32xf32> to vector<16x32xf32>
    %87 = arith.addf %84, %86 : vector<16x32xf32>
    %c0_26 = arith.constant 0 : index
    %c0_27 = arith.constant 0 : index
    %c0_28 = arith.constant 0 : index
    %88 = vector.load %arg9[%c0_26, %c0_27, %c0_28] : memref<1x16x32xf32, #tpu.memory_space<vmem>>, vector<1x16x32xf32>
    %89 = vector.shape_cast %88 : vector<1x16x32xf32> to vector<16x32xf32>
    %90 = vector.shape_cast %87 : vector<16x32xf32> to vector<1x16x32xf32>
    tpu.vector_store %arg9[%c0_26, %c0_27, %c0_28], %90 {strides = array<i32>} : memref<1x16x32xf32, #tpu.memory_space<vmem>>, vector<1x16x32xf32>,
    return
  }
  func.func @transform_0(%arg0: i32) -> (i32, i32, i32) {
    %c0_i32 = arith.constant 0 : i32
    %c0_i32_0 = arith.constant 0 : i32
    %c0_i32_1 = arith.constant 0 : i32
    return %arg0, %c0_i32, %c0_i32_0 : i32, i32, i32
  }
  func.func @transform_1(%arg0: i32) -> (i32, i32) {
    %c0_i32 = arith.constant 0 : i32
    %c0_i32_0 = arith.constant 0 : i32
    %c0_i32_1 = arith.constant 0 : i32
    return %c0_i32, %c0_i32_0 : i32, i32
  }
  func.func @transform_2(%arg0: i32) -> (i32, i32) {
    %c0_i32 = arith.constant 0 : i32
    %c0_i32_0 = arith.constant 0 : i32
    %c0_i32_1 = arith.constant 0 : i32
    return %c0_i32, %c0_i32_0 : i32, i32
  }
  func.func @transform_3(%arg0: i32) -> (i32, i32) {
    %c0_i32 = arith.constant 0 : i32
    %c0_i32_0 = arith.constant 0 : i32
    %c0_i32_1 = arith.constant 0 : i32
    return %c0_i32, %c0_i32_0 : i32, i32
  }
  func.func @transform_4(%arg0: i32) -> (i32, i32) {
    %c0_i32 = arith.constant 0 : i32
    %c0_i32_0 = arith.constant 0 : i32
    %c0_i32_1 = arith.constant 0 : i32
    return %c0_i32, %c0_i32_0 : i32, i32
  }
  func.func @transform_5(%arg0: i32) -> (i32, i32) {
    %c0_i32 = arith.constant 0 : i32
    %c0_i32_0 = arith.constant 0 : i32
    %c0_i32_1 = arith.constant 0 : i32
    return %c0_i32, %c0_i32_0 : i32, i32
  }
  func.func @transform_6(%arg0: i32) -> (i32, i32) {
    %c0_i32 = arith.constant 0 : i32
    %c0_i32_0 = arith.constant 0 : i32
    %c0_i32_1 = arith.constant 0 : i32
    return %c0_i32, %c0_i32_0 : i32, i32
  }
  func.func @transform_7(%arg0: i32) -> (i32, i32) {
    %c0_i32 = arith.constant 0 : i32
    %c0_i32_0 = arith.constant 0 : i32
    %c0_i32_1 = arith.constant 0 : i32
    return %c0_i32, %c0_i32_0 : i32, i32
  }
  func.func @transform_8(%arg0: i32) -> (i32, i32, i32) {
    %c0_i32 = arith.constant 0 : i32
    %c0_i32_0 = arith.constant 0 : i32
    %c0_i32_1 = arith.constant 0 : i32
    return %arg0, %c0_i32, %c0_i32_0 : i32, i32, i32
  }
}

</mosaic_0001>

<llo_original>
// kernel: tpu_custom_call.1
$region0: #{tpu_custom_call.1}
  #allocation0 [shape = 'u32[]', space=smem, size = 0x4, offset = 0x4, fixed_abs, tag = 'smem constant byte address 0x4 - core index']
  #allocation1 [shape = 'u32[72,128]{1,0:T(1,128)}', space=vmem, size = 0x9000, scoped, tag = 'internal scratch']
  %s0 = inlined_call_operand.hbm [shape: f32[1,16,32], index: 0, kind: input, shape index: {}]
  %s1 = inlined_call_operand.hbm [shape: f32[64,64], index: 1, kind: input, shape index: {}]
  %s2 = inlined_call_operand.hbm [shape: f32[32,96], index: 2, kind: input, shape index: {}]
  %s3 = inlined_call_operand.vmem [shape: f32[1,96], index: 3, kind: input, shape index: {}]
  %s4 = inlined_call_operand.hbm [shape: f32[32,32], index: 4, kind: input, shape index: {}]
  %s5 = inlined_call_operand.vmem [shape: f32[1,32], index: 5, kind: input, shape index: {}]
  %s6 = inlined_call_operand.vmem [shape: f32[1,32], index: 6, kind: input, shape index: {}]
  %s7 = inlined_call_operand.vmem [shape: f32[1,32], index: 7, kind: input, shape index: {}]
  %s8 = inlined_call_operand.hbm [shape: f32[1,16,32], index: 8, kind: output, shape index: {}]
  %s9 = sld [smem:[#allocation0]]
  $region58: #{tpu_custom_call.1} parent=0
    _
  %s11 = ssub.s32 1, %s9
  %s12 = scalar_select 0, %s11, %s9
  $region1: #{tpu_custom_call.1} parent=0
    #allocation2 [shape = 'u8[8192]{0}', space=vmem, size = 0x2000, scoped, tag = 'input window, operand 0, single buffered']
    #allocation3 [shape = 's32[1]{0}', space=sflag, size = 0x4, scoped, tag = 'scoped memory for tpu_custom_call.1']
    #allocation4 [shape = 's32[1]{0}', space=sflag, size = 0x4, scoped, tag = 'scoped memory for tpu_custom_call.1']
    #allocation5 [shape = 'u8[32768]{0}', space=vmem, size = 0x8000, scoped, tag = 'input window, operand 1, single buffered']
    #allocation6 [shape = 's32[1]{0}', space=sflag, size = 0x4, scoped, tag = 'scoped memory for tpu_custom_call.1']
    #allocation7 [shape = 'u8[16384]{0}', space=vmem, size = 0x4000, scoped, tag = 'input window, operand 2, single buffered']
    #allocation8 [shape = 'u8[16384]{0}', space=vmem, size = 0x4000, scoped, tag = 'input window, operand 4, single buffered']
    #allocation9 [shape = 's32[1]{0}', space=sflag, size = 0x4, scoped, tag = 'scoped memory for tpu_custom_call.1']
    #allocation10 [shape = 'u8[8192]{0}', space=vmem, size = 0x2000, scoped, tag = 'output window, operand 0, single buffered']
    %13 = vsyncpa [#allocation3], 0
    %14 = vsyncpa [#allocation6], 0
    %15 = vsyncpa [#allocation9], 0
    %16 = vsyncpa [#allocation4], 0
    // Predicated region
    $region2: #{tpu_custom_call.1} parent=1 // pred_check
      _
    $region3: #{tpu_custom_call.1} parent=1 // pred_check_branch
      %18 = sbr.rel (0) target = $region5
    $region4: #{tpu_custom_call.1} parent=1 // pred_region
      %20 = vsyncadd [#allocation3], 0
      %s21 = sshll.u32 %s0, 4
      %s22 = int_to_ptr.hbm [resolvable:$true] %s21
      %s23 = sshll.u32 [#allocation2], 4
      %s24 = int_to_ptr.vmem [resolvable:$true] %s23
      %29 = dma.hbm_to_vmem [thread:$0]  %s22, 256, %s24, [#allocation3], 128, 128, 8
    $region5: #{tpu_custom_call.1} parent=1 // pred_fallthru
      _
    // Predicated region
    $region6: #{tpu_custom_call.1} parent=1 // pred_check
      _
    $region7: #{tpu_custom_call.1} parent=1 // pred_check_branch
      %31 = sbr.rel (0) target = $region9
    $region8: #{tpu_custom_call.1} parent=1 // pred_region
      %33 = vsyncadd [#allocation6], 0
      %s34 = sshll.u32 %s1, 4
      %s35 = int_to_ptr.hbm [resolvable:$true] %s34
      %s36 = sshll.u32 [#allocation5], 4
      %s37 = int_to_ptr.vmem [resolvable:$true] %s36
      %42 = dma.hbm_to_vmem [thread:$0]  %s35, 1024, %s37, [#allocation6], 128, 128, 8
    $region9: #{tpu_custom_call.1} parent=1 // pred_fallthru
      _
    // Predicated region
    $region10: #{tpu_custom_call.1} parent=1 // pred_check
      _
    $region11: #{tpu_custom_call.1} parent=1 // pred_check_branch
      %44 = sbr.rel (0) target = $region13
    $region12: #{tpu_custom_call.1} parent=1 // pred_region
      %46 = vsyncadd [#allocation6], 0
      %s47 = sshll.u32 %s2, 4
      %s48 = int_to_ptr.hbm [resolvable:$true] %s47
      %s49 = sshll.u32 [#allocation7], 4
      %s50 = int_to_ptr.vmem [resolvable:$true] %s49
      %55 = dma.hbm_to_vmem [thread:$0]  %s48, 512, %s50, [#allocation6], 128, 128, 8
    $region13: #{tpu_custom_call.1} parent=1 // pred_fallthru
      _
    // Predicated region
    $region14: #{tpu_custom_call.1} parent=1 // pred_check
      _
    $region15: #{tpu_custom_call.1} parent=1 // pred_check_branch
      %57 = sbr.rel (0) target = $region17
    $region16: #{tpu_custom_call.1} parent=1 // pred_region
      _
    $region17: #{tpu_custom_call.1} parent=1 // pred_fallthru
      _
    // Predicated region
    $region18: #{tpu_custom_call.1} parent=1 // pred_check
      _
    $region19: #{tpu_custom_call.1} parent=1 // pred_check_branch
      %59 = sbr.rel (0) target = $region21
    $region20: #{tpu_custom_call.1} parent=1 // pred_region
      %61 = vsyncadd [#allocation9], 0
      %s62 = sshll.u32 %s4, 4
      %s63 = int_to_ptr.hbm [resolvable:$true] %s62
      %s64 = sshll.u32 [#allocation8], 4
      %s65 = int_to_ptr.vmem [resolvable:$true] %s64
      %70 = dma.hbm_to_vmem [thread:$0]  %s63, 512, %s65, [#allocation9], 128, 128, 8
    $region21: #{tpu_custom_call.1} parent=1 // pred_fallthru
      _
    // Predicated region
    $region22: #{tpu_custom_call.1} parent=1 // pred_check
      _
    $region23: #{tpu_custom_call.1} parent=1 // pred_check_branch
      %72 = sbr.rel (0) target = $region25
    $region24: #{tpu_custom_call.1} parent=1 // pred_region
      _
    $region25: #{tpu_custom_call.1} parent=1 // pred_fallthru
      _
    // Predicated region
    $region26: #{tpu_custom_call.1} parent=1 // pred_check
      _
    $region27: #{tpu_custom_call.1} parent=1 // pred_check_branch
      %74 = sbr.rel (0) target = $region29
    $region28: #{tpu_custom_call.1} parent=1 // pred_region
      _
    $region29: #{tpu_custom_call.1} parent=1 // pred_fallthru
      _
    // Predicated region
    $region30: #{tpu_custom_call.1} parent=1 // pred_check
      _
    $region31: #{tpu_custom_call.1} parent=1 // pred_check_branch
      %76 = sbr.rel (0) target = $region33
    $region32: #{tpu_custom_call.1} parent=1 // pred_region
      _
    $region33: #{tpu_custom_call.1} parent=1 // pred_fallthru
      _
    // Predicated region
    $region34: #{tpu_custom_call.1} parent=1 // pred_check
      _
    $region35: #{tpu_custom_call.1} parent=1 // pred_check_branch
      %78 = sbr.rel (0) target = $region37
    $region36: #{tpu_custom_call.1} parent=1 // pred_region
      %80 = dma.done [#allocation3], 256
    $region37: #{tpu_custom_call.1} parent=1 // pred_fallthru
      _
    // Predicated region
    $region38: #{tpu_custom_call.1} parent=1 // pred_check
      _
    $region39: #{tpu_custom_call.1} parent=1 // pred_check_branch
      %82 = sbr.rel (0) target = $region41
    $region40: #{tpu_custom_call.1} parent=1 // pred_region
      %84 = dma.done [#allocation6], 1024
    $region41: #{tpu_custom_call.1} parent=1 // pred_fallthru
      _
    // Predicated region
    $region42: #{tpu_custom_call.1} parent=1 // pred_check
      _
    $region43: #{tpu_custom_call.1} parent=1 // pred_check_branch
      %86 = sbr.rel (0) target = $region45
    $region44: #{tpu_custom_call.1} parent=1 // pred_region
      %88 = dma.done [#allocation6], 512
    $region45: #{tpu_custom_call.1} parent=1 // pred_fallthru
      _
    // Predicated region
    $region46: #{tpu_custom_call.1} parent=1 // pred_check
      _
    $region47: #{tpu_custom_call.1} parent=1 // pred_check_branch
      %90 = sbr.rel (0) target = $region49
    $region48: #{tpu_custom_call.1} parent=1 // pred_region
      %92 = dma.done [#allocation9], 512
    $region49: #{tpu_custom_call.1} parent=1 // pred_fallthru
      _
    %v93 = vld [vmem:[#allocation2] sm:$0xff]
    %v94 = vld [vmem:[#allocation2 + $0x8] sm:$0xff]
    %v95 = vld [vmem:[#allocation7] sm:$0xff]
    %v96 = vld [vmem:[#allocation7 + $0x8] sm:$0xff]
    %v97 = vld [vmem:[#allocation7 + $0x10] sm:$0xff]
    %v98 = vld [vmem:[#allocation7 + $0x18] sm:$0xff]
    %v99 = vld [vmem:[%s3] sm:$0x1]
    %v101 = vperm.slane %v99, 0
    %vm103 = vcmask 261120
    %v105 = vsel %vm103, %v93, 0
    %v108 = vsel %vm103, %v94, 0
    %110 = vmatpush.msra.mxu0 0.0
    %111 = vmatpush.msra.mxu0 0.0
    %112 = vmatpush.msra.mxu0 0.0
    %113 = vmatpush.msra.mxu0 0.0
    %114 = vmatpush.msra.mxu0 0.0
    %115 = vmatpush.msra.mxu0 0.0
    %116 = vmatpush.msra.mxu0 0.0
    %117 = vmatpush.msra.mxu0 0.0
    %118 = vmatpush.msra.mxu0 0.0
    %119 = vmatpush.msra.mxu0 0.0
    %120 = vmatpush.msra.mxu0 0.0
    %121 = vmatpush.msra.mxu0 0.0
    %122 = vmatpush.msra.mxu0 %v98
    %123 = vmatpush.msra.mxu0 %v97
    %124 = vmatpush.msra.mxu0 %v96
    %125 = vmatpush.msra.mxu0 %v95
    %126 = vmatmul.f32.gmra.mxu0 %v105
    %v127 = vpop.f32.mrf.mxu0
    %v128 = vadd.f32 %v101, %v127
    %129 = vmatmul.f32.gmra.mxu0 %v108
    %v130 = vpop.f32.mrf.mxu0
    %v131 = vadd.f32 %v101, %v130
    %132 = vdwg.mxu0
    %134 = vrot.lane.b32.xlu0 %v128, 120
    %v135 = vpop.permute.xlu0 %134
    %136 = vrot.lane.b32.xlu0 %v128, 112
    %v137 = vpop.permute.xlu0 %136
    %138 = vrot.lane.b32.xlu0 %v128, 104
    %v139 = vpop.permute.xlu0 %138
    %141 = vrot.lane.b32.xlu0 %v131, 120
    %v142 = vpop.permute.xlu0 %141
    %143 = vrot.lane.b32.xlu0 %v131, 112
    %v144 = vpop.permute.xlu0 %143
    %145 = vrot.lane.b32.xlu0 %v131, 104
    %v146 = vpop.permute.xlu0 %145
    %v147 = vld [vmem:[#allocation5] sm:$0xff]
    %v148 = vld [vmem:[#allocation5 + $0x8] sm:$0xff]
    %v149 = vld [vmem:[#allocation5 + $0x10] sm:$0xff]
    %v150 = vld [vmem:[#allocation5 + $0x18] sm:$0xff]
    %v151 = vld [vmem:[#allocation5 + $0x20] sm:$0xff]
    %v152 = vld [vmem:[#allocation5 + $0x28] sm:$0xff]
    %v153 = vld [vmem:[#allocation5 + $0x30] sm:$0xff]
    %v154 = vld [vmem:[#allocation5 + $0x38] sm:$0xff]
    %155 = vrot.lane.b32.xlu0 %v128, 96
    %v156 = vpop.permute.xlu0 %155
    %157 = vrot.lane.b32.xlu0 %v135, 96
    %v158 = vpop.permute.xlu0 %157
    %159 = vrot.lane.b32.xlu0 %v137, 96
    %v160 = vpop.permute.xlu0 %159
    %161 = vrot.lane.b32.xlu0 %v139, 96
    %v162 = vpop.permute.xlu0 %161
    %163 = vrot.lane.b32.xlu0 %v131, 96
    %v164 = vpop.permute.xlu0 %163
    %165 = vrot.lane.b32.xlu0 %v142, 96
    %v166 = vpop.permute.xlu0 %165
    %167 = vrot.lane.b32.xlu0 %v144, 96
    %v168 = vpop.permute.xlu0 %167
    %169 = vrot.lane.b32.xlu0 %v146, 96
    %v170 = vpop.permute.xlu0 %169
    %vm171 = vcmask 64512
    %v172 = vsel %vm171, %v128, 0
    %v174 = vsel %vm171, %v135, 0
    %v176 = vsel %vm171, %v137, 0
    %v178 = vsel %vm171, %v139, 0
    %v180 = vsel %vm171, %v131, 0
    %v182 = vsel %vm171, %v142, 0
    %v184 = vsel %vm171, %v144, 0
    %v186 = vsel %vm171, %v146, 0
    %v188 = vsel %vm171, %v156, 0
    %v190 = vsel %vm171, %v158, 0
    %v192 = vsel %vm171, %v160, 0
    %v194 = vsel %vm171, %v162, 0
    %v196 = vsel %vm171, %v164, 0
    %v198 = vsel %vm171, %v166, 0
    %v200 = vsel %vm171, %v168, 0
    %v202 = vsel %vm171, %v170, 0
    %204 = vmatpush.xpose.msra.mxu0 0.0
    %205 = vmatpush.xpose.msra.mxu0 0.0
    %206 = vmatpush.xpose.msra.mxu0 0.0
    %207 = vmatpush.xpose.msra.mxu0 0.0
    %208 = vmatpush.xpose.msra.mxu0 0.0
    %209 = vmatpush.xpose.msra.mxu0 0.0
    %210 = vmatpush.xpose.msra.mxu0 0.0
    %211 = vmatpush.xpose.msra.mxu0 0.0
    %212 = vmatpush.xpose.msra.mxu0 %v202
    %213 = vmatpush.xpose.msra.mxu0 %v200
    %214 = vmatpush.xpose.msra.mxu0 %v198
    %215 = vmatpush.xpose.msra.mxu0 %v196
    %216 = vmatpush.xpose.msra.mxu0 %v194
    %217 = vmatpush.xpose.msra.mxu0 %v192
    %218 = vmatpush.xpose.msra.mxu0 %v190
    %219 = vmatpush.xpose.msra.mxu0 %v188
    %220 = vmatmul.f32.gmra.mxu0 %v172
    %v221 = vpop.f32.mrf.mxu0
    %v222 = vadd.f32 %v147, %v221
    %223 = vmatmul.f32.gmra.mxu0 %v174
    %v224 = vpop.f32.mrf.mxu0
    %v225 = vadd.f32 %v148, %v224
    %226 = vmatmul.f32.gmra.mxu0 %v176
    %v227 = vpop.f32.mrf.mxu0
    %v228 = vadd.f32 %v149, %v227
    %229 = vmatmul.f32.gmra.mxu0 %v178
    %v230 = vpop.f32.mrf.mxu0
    %v231 = vadd.f32 %v150, %v230
    %232 = vmatmul.f32.gmra.mxu0 %v180
    %v233 = vpop.f32.mrf.mxu0
    %v234 = vadd.f32 %v151, %v233
    %235 = vmatmul.f32.gmra.mxu0 %v182
    %v236 = vpop.f32.mrf.mxu0
    %v237 = vadd.f32 %v152, %v236
    %238 = vmatmul.f32.gmra.mxu0 %v184
    %v239 = vpop.f32.mrf.mxu0
    %v240 = vadd.f32 %v153, %v239
    %241 = vmatmul.f32.gmra.mxu0 %v186
    %v242 = vpop.f32.mrf.mxu0
    %v243 = vadd.f32 %v154, %v242
    %244 = vdwg.mxu0
    %vm245 = vcmask 523264
    %v246 = vsel %vm245, %v222, -inf
    %247 = vmax.xlane.f32.xlu0 %v246
    %v248 = vpop.xlane.xlu0 %247
    %v249 = vsel %vm245, %v225, -inf
    %250 = vmax.xlane.f32.xlu0 %v249
    %v251 = vpop.xlane.xlu0 %250
    %v252 = vsel %vm245, %v228, -inf
    %253 = vmax.xlane.f32.xlu0 %v252
    %v254 = vpop.xlane.xlu0 %253
    %v255 = vsel %vm245, %v231, -inf
    %256 = vmax.xlane.f32.xlu0 %v255
    %v257 = vpop.xlane.xlu0 %256
    %v258 = vsel %vm245, %v234, -inf
    %259 = vmax.xlane.f32.xlu0 %v258
    %v260 = vpop.xlane.xlu0 %259
    %v261 = vsel %vm245, %v237, -inf
    %262 = vmax.xlane.f32.xlu0 %v261
    %v263 = vpop.xlane.xlu0 %262
    %v264 = vsel %vm245, %v240, -inf
    %265 = vmax.xlane.f32.xlu0 %v264
    %v266 = vpop.xlane.xlu0 %265
    %v267 = vsel %vm245, %v243, -inf
    %268 = vmax.xlane.f32.xlu0 %v267
    %v269 = vpop.xlane.xlu0 %268
    %v270 = vsub.f32 %v222, %v248
    %v271 = vsub.f32 %v225, %v251
    %v272 = vsub.f32 %v228, %v254
    %v273 = vsub.f32 %v231, %v257
    %v274 = vsub.f32 %v234, %v260
    %v275 = vsub.f32 %v237, %v263
    %v276 = vsub.f32 %v240, %v266
    %v277 = vsub.f32 %v243, %v269
    %v278 = vmul.f32 %v270, 1.442695
    %v279 = vpow.pop %v278
    %v280 = vmul.f32 %v271, 1.442695
    %v281 = vpow.pop %v280
    %v282 = vmul.f32 %v272, 1.442695
    %v283 = vpow.pop %v282
    %v284 = vmul.f32 %v273, 1.442695
    %v285 = vpow.pop %v284
    %v286 = vmul.f32 %v274, 1.442695
    %v287 = vpow.pop %v286
    %v288 = vmul.f32 %v275, 1.442695
    %v289 = vpow.pop %v288
    %v290 = vmul.f32 %v276, 1.442695
    %v291 = vpow.pop %v290
    %v292 = vmul.f32 %v277, 1.442695
    %v293 = vpow.pop %v292
    %v294 = vsel %vm245, %v279, 0.0
    %295 = vadd.xlane.f32.xlu0 %v294
    %v296 = vpop.xlane.xlu0 %295
    %v297 = vsel %vm245, %v281, 0.0
    %298 = vadd.xlane.f32.xlu0 %v297
    %v299 = vpop.xlane.xlu0 %298
    %v300 = vsel %vm245, %v283, 0.0
    %301 = vadd.xlane.f32.xlu0 %v300
    %v302 = vpop.xlane.xlu0 %301
    %v303 = vsel %vm245, %v285, 0.0
    %304 = vadd.xlane.f32.xlu0 %v303
    %v305 = vpop.xlane.xlu0 %304
    %v306 = vsel %vm245, %v287, 0.0
    %307 = vadd.xlane.f32.xlu0 %v306
    %v308 = vpop.xlane.xlu0 %307
    %v309 = vsel %vm245, %v289, 0.0
    %310 = vadd.xlane.f32.xlu0 %v309
    %v311 = vpop.xlane.xlu0 %310
    %v312 = vsel %vm245, %v291, 0.0
    %313 = vadd.xlane.f32.xlu0 %v312
    %v314 = vpop.xlane.xlu0 %313
    %v315 = vsel %vm245, %v293, 0.0
    %316 = vadd.xlane.f32.xlu0 %v315
    %v317 = vpop.xlane.xlu0 %316
    %v318 = vrcp.pop %v296
    %v319 = vrcp.pop %v299
    %v320 = vrcp.pop %v302
    %v321 = vrcp.pop %v305
    %v322 = vrcp.pop %v308
    %v323 = vrcp.pop %v311
    %v324 = vrcp.pop %v314
    %v325 = vrcp.pop %v317
    %v326 = vmul.f32 %v279, %v318
    %v327 = vmul.f32 %v281, %v319
    %v328 = vmul.f32 %v283, %v320
    %v329 = vmul.f32 %v285, %v321
    %v330 = vmul.f32 %v287, %v322
    %v331 = vmul.f32 %v289, %v323
    %v332 = vmul.f32 %v291, %v324
    %v333 = vmul.f32 %v293, %v325
    %334 = vrot.lane.b32.xlu0 %v128, 64
    %v335 = vpop.permute.xlu0 %334
    %336 = vrot.lane.b32.xlu0 %v135, 64
    %v337 = vpop.permute.xlu0 %336
    %338 = vrot.lane.b32.xlu0 %v137, 64
    %v339 = vpop.permute.xlu0 %338
    %340 = vrot.lane.b32.xlu0 %v139, 64
    %v341 = vpop.permute.xlu0 %340
    %342 = vrot.lane.b32.xlu0 %v131, 64
    %v343 = vpop.permute.xlu0 %342
    %344 = vrot.lane.b32.xlu0 %v142, 64
    %v345 = vpop.permute.xlu0 %344
    %346 = vrot.lane.b32.xlu0 %v144, 64
    %v347 = vpop.permute.xlu0 %346
    %348 = vrot.lane.b32.xlu0 %v146, 64
    %v349 = vpop.permute.xlu0 %348
    %v359 = vsel %vm245, %v326, 0
    %v362 = vsel %vm245, %v327, 0
    %v365 = vsel %vm245, %v328, 0
    %v368 = vsel %vm245, %v329, 0
    %v371 = vsel %vm245, %v330, 0
    %v374 = vsel %vm245, %v331, 0
    %v377 = vsel %vm245, %v332, 0
    %v380 = vsel %vm245, %v333, 0
    %382 = vmatpush.msra.mxu0 0.0
    %383 = vmatpush.msra.mxu0 0.0
    %384 = vmatpush.msra.mxu0 0.0
    %385 = vmatpush.msra.mxu0 0.0
    %386 = vmatpush.msra.mxu0 0.0
    %387 = vmatpush.msra.mxu0 0.0
    %388 = vmatpush.msra.mxu0 0.0
    %389 = vmatpush.msra.mxu0 0.0
    %390 = vmatpush.msra.mxu0 %v349
    %391 = vmatpush.msra.mxu0 %v347
    %392 = vmatpush.msra.mxu0 %v345
    %393 = vmatpush.msra.mxu0 %v343
    %394 = vmatpush.msra.mxu0 %v341
    %395 = vmatpush.msra.mxu0 %v339
    %396 = vmatpush.msra.mxu0 %v337
    %397 = vmatpush.msra.mxu0 %v335
    %398 = vmatmul.f32.gmra.mxu0 %v359
    %v399 = vpop.f32.mrf.mxu0
    %v400 = vadd.f32 0.0, %v399
    %401 = vmatmul.f32.gmra.mxu0 %v362
    %v402 = vpop.f32.mrf.mxu0
    %v403 = vadd.f32 0.0, %v402
    %404 = vmatmul.f32.gmra.mxu0 %v365
    %v405 = vpop.f32.mrf.mxu0
    %v406 = vadd.f32 0.0, %v405
    %407 = vmatmul.f32.gmra.mxu0 %v368
    %v408 = vpop.f32.mrf.mxu0
    %v409 = vadd.f32 0.0, %v408
    %410 = vmatmul.f32.gmra.mxu0 %v371
    %v411 = vpop.f32.mrf.mxu0
    %v412 = vadd.f32 0.0, %v411
    %413 = vmatmul.f32.gmra.mxu0 %v374
    %v414 = vpop.f32.mrf.mxu0
    %v415 = vadd.f32 0.0, %v414
    %416 = vmatmul.f32.gmra.mxu0 %v377
    %v417 = vpop.f32.mrf.mxu0
    %v418 = vadd.f32 0.0, %v417
    %419 = vmatmul.f32.gmra.mxu0 %v380
    %v420 = vpop.f32.mrf.mxu0
    %v421 = vadd.f32 0.0, %v420
    %422 = vdwg.mxu0
    %424 = vrot.lane.b32.xlu0 %v403, 8
    %v425 = vpop.permute.xlu0 %424
    %428 = vrot.lane.b32.xlu0 %v406, 16
    %v429 = vpop.permute.xlu0 %428
    %432 = vrot.lane.b32.xlu0 %v409, 24
    %v433 = vpop.permute.xlu0 %432
    %v435 = vsel %vm171, %v400, %v425
    %vm436 = vcmask 130048
    %v437 = vsel %vm436, %v435, %v429
    %vm438 = vcmask 195584
    %v439 = vsel %vm438, %v437, %v433
    %441 = vrot.lane.b32.xlu0 %v415, 8
    %v442 = vpop.permute.xlu0 %441
    %445 = vrot.lane.b32.xlu0 %v418, 16
    %v446 = vpop.permute.xlu0 %445
    %449 = vrot.lane.b32.xlu0 %v421, 24
    %v450 = vpop.permute.xlu0 %449
    %v452 = vsel %vm171, %v412, %v442
    %v453 = vsel %vm436, %v452, %v446
    %v454 = vsel %vm438, %v453, %v450
    %v455 = vld [vmem:[#allocation8] sm:$0xff]
    %v456 = vld [vmem:[#allocation8 + $0x8] sm:$0xff]
    %v457 = vld [vmem:[#allocation8 + $0x10] sm:$0xff]
    %v458 = vld [vmem:[#allocation8 + $0x18] sm:$0xff]
    %v459 = vld [vmem:[%s5] sm:$0x1]
    %v461 = vperm.slane %v459, 0
    %v464 = vsel %vm103, %v439, 0
    %v467 = vsel %vm103, %v454, 0
    %469 = vmatpush.msra.mxu0 0.0
    %470 = vmatpush.msra.mxu0 0.0
    %471 = vmatpush.msra.mxu0 0.0
    %472 = vmatpush.msra.mxu0 0.0
    %473 = vmatpush.msra.mxu0 0.0
    %474 = vmatpush.msra.mxu0 0.0
    %475 = vmatpush.msra.mxu0 0.0
    %476 = vmatpush.msra.mxu0 0.0
    %477 = vmatpush.msra.mxu0 0.0
    %478 = vmatpush.msra.mxu0 0.0
    %479 = vmatpush.msra.mxu0 0.0
    %480 = vmatpush.msra.mxu0 0.0
    %481 = vmatpush.msra.mxu0 %v458
    %482 = vmatpush.msra.mxu0 %v457
    %483 = vmatpush.msra.mxu0 %v456
    %484 = vmatpush.msra.mxu0 %v455
    %485 = vmatmul.f32.gmra.mxu0 %v464
    %v486 = vpop.f32.mrf.mxu0
    %v487 = vadd.f32 %v461, %v486
    %488 = vmatmul.f32.gmra.mxu0 %v467
    %v489 = vpop.f32.mrf.mxu0
    %v490 = vadd.f32 %v461, %v489
    %491 = vdwg.mxu0
    %v492 = vsel %vm103, %v487, 0.0
    %493 = vadd.xlane.f32.xlu0 %v492
    %v494 = vpop.xlane.xlu0 %493
    %v495 = vsel %vm103, %v490, 0.0
    %496 = vadd.xlane.f32.xlu0 %v495
    %v497 = vpop.xlane.xlu0 %496
    %v498 = vrcp.pop 32.0
    %v499 = vmul.f32 32.0, %v498
    %v500 = vsub.f32 1.0, %v499
    %v501 = vmul.f32 %v498, %v500
    %v502 = vadd.f32 %v498, %v501
    %vm503 = vweird.f32 %v498
    %v504 = vsel %vm503, %v498, %v502
    %v505 = vmul.f32 %v494, %v504
    %v506 = vmul.f32 %v497, %v504
    %v507 = vmul.f32 %v487, %v487
    %v508 = vmul.f32 %v490, %v490
    %v509 = vsel %vm103, %v507, 0.0
    %510 = vadd.xlane.f32.xlu0 %v509
    %v511 = vpop.xlane.xlu0 %510
    %v512 = vsel %vm103, %v508, 0.0
    %513 = vadd.xlane.f32.xlu0 %v512
    %v514 = vpop.xlane.xlu0 %513
    %v515 = vmul.f32 %v511, %v504
    %v516 = vmul.f32 %v514, %v504
    %v517 = vmul.f32 %v505, %v505
    %v518 = vmul.f32 %v506, %v506
    %v519 = vsub.f32 %v515, %v517
    %v520 = vsub.f32 %v516, %v518
    %v521 = vsub.f32 %v487, %v505
    %v522 = vsub.f32 %v490, %v506
    %v523 = vadd.f32 %v519, 1e-05
    %v524 = vadd.f32 %v520, 1e-05
    %v525 = vrsqrt.pop %v523
    %v526 = vmul.f32 %v525, %v523
    %v527 = vmul.f32 %v526, %v525
    %v528 = vmul.f32 0.5, %v527
    %v529 = vsub.f32 1.5, %v528
    %v530 = vmul.f32 %v525, %v529
    %vm531 = vweird.f32 %v523
    %vm532 = vweird.f32 %v525
    %vm533 = vmor %vm531, %vm532
    %v534 = vsel %vm533, %v525, %v530
    %v535 = vrsqrt.pop %v524
    %v536 = vmul.f32 %v535, %v524
    %v537 = vmul.f32 %v536, %v535
    %v538 = vmul.f32 0.5, %v537
    %v539 = vsub.f32 1.5, %v538
    %v540 = vmul.f32 %v535, %v539
    %vm541 = vweird.f32 %v524
    %vm542 = vweird.f32 %v535
    %vm543 = vmor %vm541, %vm542
    %v544 = vsel %vm543, %v535, %v540
    %v545 = vmul.f32 %v521, %v534
    %v546 = vmul.f32 %v522, %v544
    %v547 = vld [vmem:[%s6] sm:$0x1]
    %v549 = vperm.slane %v547, 0
    %v551 = vmul.f32 %v545, %v549
    %v552 = vmul.f32 %v546, %v549
    %v553 = vld [vmem:[%s7] sm:$0x1]
    %v555 = vperm.slane %v553, 0
    %v557 = vadd.f32 %v551, %v555
    %v558 = vadd.f32 %v552, %v555
    %559 = vst.msk [vmem:[#allocation10] sm:$0xff] %vm103, %v557
    %560 = vst.msk [vmem:[#allocation10 + $0x8] sm:$0xff] %vm103, %v558
    // Predicated region
    $region50: #{tpu_custom_call.1} parent=1 // pred_check
      _
    $region51: #{tpu_custom_call.1} parent=1 // pred_check_branch
      %562 = sbr.rel (0) target = $region53
    $region52: #{tpu_custom_call.1} parent=1 // pred_region
      %564 = vsyncadd [#allocation4], 0
      %s565 = sshll.u32 [#allocation10], 4
      %s566 = int_to_ptr.vmem [resolvable:$true] %s565
      %s567 = sshll.u32 %s8, 4
      %s568 = int_to_ptr.hbm [resolvable:$true] %s567
      %573 = dma.vmem_to_hbm [thread:$0]  %s566, 256, %s568, [#allocation4], 128, 128, 8
    $region53: #{tpu_custom_call.1} parent=1 // pred_fallthru
      _
    // Predicated region
    $region54: #{tpu_custom_call.1} parent=1 // pred_check
      _
    $region55: #{tpu_custom_call.1} parent=1 // pred_check_branch
      %575 = sbr.rel (0) target = $region57
    $region56: #{tpu_custom_call.1} parent=1 // pred_region
      %577 = dma.done [#allocation4], 256
    $region57: #{tpu_custom_call.1} parent=1 // pred_fallthru
      _
    %578 = vsyncpa [#allocation3], 1
    %579 = vsyncpa [#allocation6], 1
    %580 = vsyncpa [#allocation9], 1
    %581 = vsyncpa [#allocation4], 1

// kernel: tpu_custom_call.1
$region0: #{tpu_custom_call.1}
  #allocation0 [shape = 'u32[]', space=smem, size = 0x4, offset = 0x4, fixed_abs, tag = 'smem constant byte address 0x4 - core index']
  #allocation1 [shape = 'u32[72,128]{1,0:T(1,128)}', space=vmem, size = 0x9000, scoped, tag = 'internal scratch']
  %s0 = inlined_call_operand.hbm [shape: f32[1,16,32], index: 0, kind: input, shape index: {}]
  %s1 = inlined_call_operand.hbm [shape: f32[64,64], index: 1, kind: input, shape index: {}]
  %s2 = inlined_call_operand.hbm [shape: f32[32,96], index: 2, kind: input, shape index: {}]
  %s3 = inlined_call_operand.vmem [shape: f32[1,96], index: 3, kind: input, shape index: {}]
  %s4 = inlined_call_operand.hbm [shape: f32[32,32], index: 4, kind: input, shape index: {}]
  %s5 = inlined_call_operand.vmem [shape: f32[1,32], index: 5, kind: input, shape index: {}]
  %s6 = inlined_call_operand.vmem [shape: f32[1,32], index: 6, kind: input, shape index: {}]
  %s7 = inlined_call_operand.vmem [shape: f32[1,32], index: 7, kind: input, shape index: {}]
  %s8 = inlined_call_operand.hbm [shape: f32[1,16,32], index: 8, kind: output, shape index: {}]
  %s9 = sld [smem:[#allocation0]]
  $region58: #{tpu_custom_call.1} parent=0
    _
  %s11 = ssub.s32 1, %s9
  %s12 = scalar_select 0, %s11, %s9
  $region1: #{tpu_custom_call.1} parent=0
    #allocation2 [shape = 'u8[8192]{0}', space=vmem, size = 0x2000, scoped, tag = 'input window, operand 0, single buffered']
    #allocation3 [shape = 's32[1]{0}', space=sflag, size = 0x4, scoped, tag = 'scoped memory for tpu_custom_call.1']
    #allocation4 [shape = 's32[1]{0}', space=sflag, size = 0x4, scoped, tag = 'scoped memory for tpu_custom_call.1']
    #allocation5 [shape = 'u8[32768]{0}', space=vmem, size = 0x8000, scoped, tag = 'input window, operand 1, single buffered']
    #allocation6 [shape = 's32[1]{0}', space=sflag, size = 0x4, scoped, tag = 'scoped memory for tpu_custom_call.1']
    #allocation7 [shape = 'u8[16384]{0}', space=vmem, size = 0x4000, scoped, tag = 'input window, operand 2, single buffered']
    #allocation8 [shape = 'u8[16384]{0}', space=vmem, size = 0x4000, scoped, tag = 'input window, operand 4, single buffered']
    #allocation9 [shape = 's32[1]{0}', space=sflag, size = 0x4, scoped, tag = 'scoped memory for tpu_custom_call.1']
    #allocation10 [shape = 'u8[8192]{0}', space=vmem, size = 0x2000, scoped, tag = 'output window, operand 0, single buffered']
    %13 = vsyncpa [#allocation3], 0
    %14 = vsyncpa [#allocation6], 0
    %15 = vsyncpa [#allocation9], 0
    %16 = vsyncpa [#allocation4], 0
    // Predicated region
    $region2: #{tpu_custom_call.1} parent=1 // pred_check
      _
    $region3: #{tpu_custom_call.1} parent=1 // pred_check_branch
      %18 = sbr.rel (0) target = $region5
    $region4: #{tpu_custom_call.1} parent=1 // pred_region
      %20 = vsyncadd [#allocation3], 0
      %s21 = sshll.u32 %s0, 4
      %s22 = int_to_ptr.hbm [resolvable:$true] %s21
      %s23 = sshll.u32 [#allocation2], 4
      %s24 = int_to_ptr.vmem [resolvable:$true] %s23
      %29 = dma.hbm_to_vmem [thread:$0]  %s22, 256, %s24, [#allocation3], 128, 128, 8
    $region5: #{tpu_custom_call.1} parent=1 // pred_fallthru
      _
    // Predicated region
    $region6: #{tpu_custom_call.1} parent=1 // pred_check
      _
    $region7: #{tpu_custom_call.1} parent=1 // pred_check_branch
      %31 = sbr.rel (0) target = $region9
    $region8: #{tpu_custom_call.1} parent=1 // pred_region
      %33 = vsyncadd [#allocation6], 0
      %s34 = sshll.u32 %s1, 4
      %s35 = int_to_ptr.hbm [resolvable:$true] %s34
      %s36 = sshll.u32 [#allocation5], 4
      %s37 = int_to_ptr.vmem [resolvable:$true] %s36
      %42 = dma.hbm_to_vmem [thread:$0]  %s35, 1024, %s37, [#allocation6], 128, 128, 8
    $region9: #{tpu_custom_call.1} parent=1 // pred_fallthru
      _
    // Predicated region
    $region10: #{tpu_custom_call.1} parent=1 // pred_check
      _
    $region11: #{tpu_custom_call.1} parent=1 // pred_check_branch
      %44 = sbr.rel (0) target = $region13
    $region12: #{tpu_custom_call.1} parent=1 // pred_region
      %46 = vsyncadd [#allocation6], 0
      %s47 = sshll.u32 %s2, 4
      %s48 = int_to_ptr.hbm [resolvable:$true] %s47
      %s49 = sshll.u32 [#allocation7], 4
      %s50 = int_to_ptr.vmem [resolvable:$true] %s49
      %55 = dma.hbm_to_vmem [thread:$0]  %s48, 512, %s50, [#allocation6], 128, 128, 8
    $region13: #{tpu_custom_call.1} parent=1 // pred_fallthru
      _
    // Predicated region
    $region14: #{tpu_custom_call.1} parent=1 // pred_check
      _
    $region15: #{tpu_custom_call.1} parent=1 // pred_check_branch
      %57 = sbr.rel (0) target = $region17
    $region16: #{tpu_custom_call.1} parent=1 // pred_region
      _
    $region17: #{tpu_custom_call.1} parent=1 // pred_fallthru
      _
    // Predicated region
    $region18: #{tpu_custom_call.1} parent=1 // pred_check
      _
    $region19: #{tpu_custom_call.1} parent=1 // pred_check_branch
      %59 = sbr.rel (0) target = $region21
    $region20: #{tpu_custom_call.1} parent=1 // pred_region
      %61 = vsyncadd [#allocation9], 0
      %s62 = sshll.u32 %s4, 4
      %s63 = int_to_ptr.hbm [resolvable:$true] %s62
      %s64 = sshll.u32 [#allocation8], 4
      %s65 = int_to_ptr.vmem [resolvable:$true] %s64
      %70 = dma.hbm_to_vmem [thread:$0]  %s63, 512, %s65, [#allocation9], 128, 128, 8
    $region21: #{tpu_custom_call.1} parent=1 // pred_fallthru
      _
    // Predicated region
    $region22: #{tpu_custom_call.1} parent=1 // pred_check
      _
    $region23: #{tpu_custom_call.1} parent=1 // pred_check_branch
      %72 = sbr.rel (0) target = $region25
    $region24: #{tpu_custom_call.1} parent=1 // pred_region
      _
    $region25: #{tpu_custom_call.1} parent=1 // pred_fallthru
      _
    // Predicated region
    $region26: #{tpu_custom_call.1} parent=1 // pred_check
      _
    $region27: #{tpu_custom_call.1} parent=1 // pred_check_branch
      %74 = sbr.rel (0) target = $region29
    $region28: #{tpu_custom_call.1} parent=1 // pred_region
      _
    $region29: #{tpu_custom_call.1} parent=1 // pred_fallthru
      _
    // Predicated region
    $region30: #{tpu_custom_call.1} parent=1 // pred_check
      _
    $region31: #{tpu_custom_call.1} parent=1 // pred_check_branch
      %76 = sbr.rel (0) target = $region33
    $region32: #{tpu_custom_call.1} parent=1 // pred_region
      _
    $region33: #{tpu_custom_call.1} parent=1 // pred_fallthru
      _
    // Predicated region
    $region34: #{tpu_custom_call.1} parent=1 // pred_check
      _
    $region35: #{tpu_custom_call.1} parent=1 // pred_check_branch
      %78 = sbr.rel (0) target = $region37
    $region36: #{tpu_custom_call.1} parent=1 // pred_region
      %80 = dma.done [#allocation3], 256
    $region37: #{tpu_custom_call.1} parent=1 // pred_fallthru
      _
    // Predicated region
    $region38: #{tpu_custom_call.1} parent=1 // pred_check
      _
    $region39: #{tpu_custom_call.1} parent=1 // pred_check_branch
      %82 = sbr.rel (0) target = $region41
    $region40: #{tpu_custom_call.1} parent=1 // pred_region
      %84 = dma.done [#allocation6], 1024
    $region41: #{tpu_custom_call.1} parent=1 // pred_fallthru
      _
    // Predicated region
    $region42: #{tpu_custom_call.1} parent=1 // pred_check
      _
    $region43: #{tpu_custom_call.1} parent=1 // pred_check_branch
      %86 = sbr.rel (0) target = $region45
    $region44: #{tpu_custom_call.1} parent=1 // pred_region
      %88 = dma.done [#allocation6], 512
    $region45: #{tpu_custom_call.1} parent=1 // pred_fallthru
      _
    // Predicated region
    $region46: #{tpu_custom_call.1} parent=1 // pred_check
      _
    $region47: #{tpu_custom_call.1} parent=1 // pred_check_branch
      %90 = sbr.rel (0) target = $region49
    $region48: #{tpu_custom_call.1} parent=1 // pred_region
      %92 = dma.done [#allocation9], 512
    $region49: #{tpu_custom_call.1} parent=1 // pred_fallthru
      _
    %v93 = vld [vmem:[#allocation2] sm:$0xff]
    %v94 = vld [vmem:[#allocation2 + $0x8] sm:$0xff]
    %v95 = vld [vmem:[#allocation7] sm:$0xff]
    %v96 = vld [vmem:[#allocation7 + $0x8] sm:$0xff]
    %v97 = vld [vmem:[#allocation7 + $0x10] sm:$0xff]
    %v98 = vld [vmem:[#allocation7 + $0x18] sm:$0xff]
    %v99 = vld [vmem:[%s3] sm:$0x1]
    %v101 = vperm.slane %v99, 0
    %vm103 = vcmask 261120
    %v105 = vsel %vm103, %v93, 0
    %v108 = vsel %vm103, %v94, 0
    %110 = vmatpush.msra.mxu0 0.0
    %111 = vmatpush.msra.mxu0 0.0
    %112 = vmatpush.msra.mxu0 0.0
    %113 = vmatpush.msra.mxu0 0.0
    %114 = vmatpush.msra.mxu0 0.0
    %115 = vmatpush.msra.mxu0 0.0
    %116 = vmatpush.msra.mxu0 0.0
    %117 = vmatpush.msra.mxu0 0.0
    %118 = vmatpush.msra.mxu0 0.0
    %119 = vmatpush.msra.mxu0 0.0
    %120 = vmatpush.msra.mxu0 0.0
    %121 = vmatpush.msra.mxu0 0.0
    %122 = vmatpush.msra.mxu0 %v98
    %123 = vmatpush.msra.mxu0 %v97
    %124 = vmatpush.msra.mxu0 %v96
    %125 = vmatpush.msra.mxu0 %v95
    %126 = vmatmul.f32.gmra.mxu0 %v105
    %v127 = vpop.f32.mrf.mxu0
    %v128 = vadd.f32 %v101, %v127
    %129 = vmatmul.f32.gmra.mxu0 %v108
    %v130 = vpop.f32.mrf.mxu0
    %v131 = vadd.f32 %v101, %v130
    %132 = vdwg.mxu0
    %134 = vrot.lane.b32.xlu0 %v128, 120
    %v135 = vpop.permute.xlu0 %134
    %136 = vrot.lane.b32.xlu0 %v128, 112
    %v137 = vpop.permute.xlu0 %136
    %138 = vrot.lane.b32.xlu0 %v128, 104
    %v139 = vpop.permute.xlu0 %138
    %141 = vrot.lane.b32.xlu0 %v131, 120
    %v142 = vpop.permute.xlu0 %141
    %143 = vrot.lane.b32.xlu0 %v131, 112
    %v144 = vpop.permute.xlu0 %143
    %145 = vrot.lane.b32.xlu0 %v131, 104
    %v146 = vpop.permute.xlu0 %145
    %v147 = vld [vmem:[#allocation5] sm:$0xff]
    %v148 = vld [vmem:[#allocation5 + $0x8] sm:$0xff]
    %v149 = vld [vmem:[#allocation5 + $0x10] sm:$0xff]
    %v150 = vld [vmem:[#allocation5 + $0x18] sm:$0xff]
    %v151 = vld [vmem:[#allocation5 + $0x20] sm:$0xff]
    %v152 = vld [vmem:[#allocation5 + $0x28] sm:$0xff]
    %v153 = vld [vmem:[#allocation5 + $0x30] sm:$0xff]
    %v154 = vld [vmem:[#allocation5 + $0x38] sm:$0xff]
    %155 = vrot.lane.b32.xlu0 %v128, 96
    %v156 = vpop.permute.xlu0 %155
    %157 = vrot.lane.b32.xlu0 %v135, 96
    %v158 = vpop.permute.xlu0 %157
    %159 = vrot.lane.b32.xlu0 %v137, 96
    %v160 = vpop.permute.xlu0 %159
    %161 = vrot.lane.b32.xlu0 %v139, 96
    %v162 = vpop.permute.xlu0 %161
    %163 = vrot.lane.b32.xlu0 %v131, 96
    %v164 = vpop.permute.xlu0 %163
    %165 = vrot.lane.b32.xlu0 %v142, 96
    %v166 = vpop.permute.xlu0 %165
    %167 = vrot.lane.b32.xlu0 %v144, 96
    %v168 = vpop.permute.xlu0 %167
    %169 = vrot.lane.b32.xlu0 %v146, 96
    %v170 = vpop.permute.xlu0 %169
    %vm171 = vcmask 64512
    %v172 = vsel %vm171, %v128, 0
    %v174 = vsel %vm171, %v135, 0
    %v176 = vsel %vm171, %v137, 0
    %v178 = vsel %vm171, %v139, 0
    %v180 = vsel %vm171, %v131, 0
    %v182 = vsel %vm171, %v142, 0
    %v184 = vsel %vm171, %v144, 0
    %v186 = vsel %vm171, %v146, 0
    %v188 = vsel %vm171, %v156, 0
    %v190 = vsel %vm171, %v158, 0
    %v192 = vsel %vm171, %v160, 0
    %v194 = vsel %vm171, %v162, 0
    %v196 = vsel %vm171, %v164, 0
    %v198 = vsel %vm171, %v166, 0
    %v200 = vsel %vm171, %v168, 0
    %v202 = vsel %vm171, %v170, 0
    %204 = vmatpush.xpose.msra.mxu0 0.0
    %205 = vmatpush.xpose.msra.mxu0 0.0
    %206 = vmatpush.xpose.msra.mxu0 0.0
    %207 = vmatpush.xpose.msra.mxu0 0.0
    %208 = vmatpush.xpose.msra.mxu0 0.0
    %209 = vmatpush.xpose.msra.mxu0 0.0
    %210 = vmatpush.xpose.msra.mxu0 0.0
    %211 = vmatpush.xpose.msra.mxu0 0.0
    %212 = vmatpush.xpose.msra.mxu0 %v202
    %213 = vmatpush.xpose.msra.mxu0 %v200
    %214 = vmatpush.xpose.msra.mxu0 %v198
    %215 = vmatpush.xpose.msra.mxu0 %v196
    %216 = vmatpush.xpose.msra.mxu0 %v194
    %217 = vmatpush.xpose.msra.mxu0 %v192
    %218 = vmatpush.xpose.msra.mxu0 %v190
    %219 = vmatpush.xpose.msra.mxu0 %v188
    %220 = vmatmul.f32.gmra.mxu0 %v172
    %v221 = vpop.f32.mrf.mxu0
    %v222 = vadd.f32 %v147, %v221
    %223 = vmatmul.f32.gmra.mxu0 %v174
    %v224 = vpop.f32.mrf.mxu0
    %v225 = vadd.f32 %v148, %v224
    %226 = vmatmul.f32.gmra.mxu0 %v176
    %v227 = vpop.f32.mrf.mxu0
    %v228 = vadd.f32 %v149, %v227
    %229 = vmatmul.f32.gmra.mxu0 %v178
    %v230 = vpop.f32.mrf.mxu0
    %v231 = vadd.f32 %v150, %v230
    %232 = vmatmul.f32.gmra.mxu0 %v180
    %v233 = vpop.f32.mrf.mxu0
    %v234 = vadd.f32 %v151, %v233
    %235 = vmatmul.f32.gmra.mxu0 %v182
    %v236 = vpop.f32.mrf.mxu0
    %v237 = vadd.f32 %v152, %v236
    %238 = vmatmul.f32.gmra.mxu0 %v184
    %v239 = vpop.f32.mrf.mxu0
    %v240 = vadd.f32 %v153, %v239
    %241 = vmatmul.f32.gmra.mxu0 %v186
    %v242 = vpop.f32.mrf.mxu0
    %v243 = vadd.f32 %v154, %v242
    %244 = vdwg.mxu0
    %vm245 = vcmask 523264
    %v246 = vsel %vm245, %v222, -inf
    %247 = vmax.xlane.f32.xlu0 %v246
    %v248 = vpop.xlane.xlu0 %247
    %v249 = vsel %vm245, %v225, -inf
    %250 = vmax.xlane.f32.xlu0 %v249
    %v251 = vpop.xlane.xlu0 %250
    %v252 = vsel %vm245, %v228, -inf
    %253 = vmax.xlane.f32.xlu0 %v252
    %v254 = vpop.xlane.xlu0 %253
    %v255 = vsel %vm245, %v231, -inf
    %256 = vmax.xlane.f32.xlu0 %v255
    %v257 = vpop.xlane.xlu0 %256
    %v258 = vsel %vm245, %v234, -inf
    %259 = vmax.xlane.f32.xlu0 %v258
    %v260 = vpop.xlane.xlu0 %259
    %v261 = vsel %vm245, %v237, -inf
    %262 = vmax.xlane.f32.xlu0 %v261
    %v263 = vpop.xlane.xlu0 %262
    %v264 = vsel %vm245, %v240, -inf
    %265 = vmax.xlane.f32.xlu0 %v264
    %v266 = vpop.xlane.xlu0 %265
    %v267 = vsel %vm245, %v243, -inf
    %268 = vmax.xlane.f32.xlu0 %v267
    %v269 = vpop.xlane.xlu0 %268
    %v270 = vsub.f32 %v222, %v248
    %v271 = vsub.f32 %v225, %v251
    %v272 = vsub.f32 %v228, %v254
    %v273 = vsub.f32 %v231, %v257
    %v274 = vsub.f32 %v234, %v260
    %v275 = vsub.f32 %v237, %v263
    %v276 = vsub.f32 %v240, %v266
    %v277 = vsub.f32 %v243, %v269
    %v278 = vmul.f32 %v270, 1.442695
    %v279 = vpow.pop %v278
    %v280 = vmul.f32 %v271, 1.442695
    %v281 = vpow.pop %v280
    %v282 = vmul.f32 %v272, 1.442695
    %v283 = vpow.pop %v282
    %v284 = vmul.f32 %v273, 1.442695
    %v285 = vpow.pop %v284
    %v286 = vmul.f32 %v274, 1.442695
    %v287 = vpow.pop %v286
    %v288 = vmul.f32 %v275, 1.442695
    %v289 = vpow.pop %v288
    %v290 = vmul.f32 %v276, 1.442695
    %v291 = vpow.pop %v290
    %v292 = vmul.f32 %v277, 1.442695
    %v293 = vpow.pop %v292
    %v294 = vsel %vm245, %v279, 0.0
    %295 = vadd.xlane.f32.xlu0 %v294
    %v296 = vpop.xlane.xlu0 %295
    %v297 = vsel %vm245, %v281, 0.0
    %298 = vadd.xlane.f32.xlu0 %v297
    %v299 = vpop.xlane.xlu0 %298
    %v300 = vsel %vm245, %v283, 0.0
    %301 = vadd.xlane.f32.xlu0 %v300
    %v302 = vpop.xlane.xlu0 %301
    %v303 = vsel %vm245, %v285, 0.0
    %304 = vadd.xlane.f32.xlu0 %v303
    %v305 = vpop.xlane.xlu0 %304
    %v306 = vsel %vm245, %v287, 0.0
    %307 = vadd.xlane.f32.xlu0 %v306
    %v308 = vpop.xlane.xlu0 %307
    %v309 = vsel %vm245, %v289, 0.0
    %310 = vadd.xlane.f32.xlu0 %v309
    %v311 = vpop.xlane.xlu0 %310
    %v312 = vsel %vm245, %v291, 0.0
    %313 = vadd.xlane.f32.xlu0 %v312
    %v314 = vpop.xlane.xlu0 %313
    %v315 = vsel %vm245, %v293, 0.0
    %316 = vadd.xlane.f32.xlu0 %v315
    %v317 = vpop.xlane.xlu0 %316
    %v318 = vrcp.pop %v296
    %v319 = vrcp.pop %v299
    %v320 = vrcp.pop %v302
    %v321 = vrcp.pop %v305
    %v322 = vrcp.pop %v308
    %v323 = vrcp.pop %v311
    %v324 = vrcp.pop %v314
    %v325 = vrcp.pop %v317
    %v326 = vmul.f32 %v279, %v318
    %v327 = vmul.f32 %v281, %v319
    %v328 = vmul.f32 %v283, %v320
    %v329 = vmul.f32 %v285, %v321
    %v330 = vmul.f32 %v287, %v322
    %v331 = vmul.f32 %v289, %v323
    %v332 = vmul.f32 %v291, %v324
    %v333 = vmul.f32 %v293, %v325
    %334 = vrot.lane.b32.xlu0 %v128, 64
    %v335 = vpop.permute.xlu0 %334
    %336 = vrot.lane.b32.xlu0 %v135, 64
    %v337 = vpop.permute.xlu0 %336
    %338 = vrot.lane.b32.xlu0 %v137, 64
    %v339 = vpop.permute.xlu0 %338
    %340 = vrot.lane.b32.xlu0 %v139, 64
    %v341 = vpop.permute.xlu0 %340
    %342 = vrot.lane.b32.xlu0 %v131, 64
    %v343 = vpop.permute.xlu0 %342
    %344 = vrot.lane.b32.xlu0 %v142, 64
    %v345 = vpop.permute.xlu0 %344
    %346 = vrot.lane.b32.xlu0 %v144, 64
    %v347 = vpop.permute.xlu0 %346
    %348 = vrot.lane.b32.xlu0 %v146, 64
    %v349 = vpop.permute.xlu0 %348
    %v359 = vsel %vm245, %v326, 0
    %v362 = vsel %vm245, %v327, 0
    %v365 = vsel %vm245, %v328, 0
    %v368 = vsel %vm245, %v329, 0
    %v371 = vsel %vm245, %v330, 0
    %v374 = vsel %vm245, %v331, 0
    %v377 = vsel %vm245, %v332, 0
    %v380 = vsel %vm245, %v333, 0
    %382 = vmatpush.msra.mxu0 0.0
    %383 = vmatpush.msra.mxu0 0.0
    %384 = vmatpush.msra.mxu0 0.0
    %385 = vmatpush.msra.mxu0 0.0
    %386 = vmatpush.msra.mxu0 0.0
    %387 = vmatpush.msra.mxu0 0.0
    %388 = vmatpush.msra.mxu0 0.0
    %389 = vmatpush.msra.mxu0 0.0
    %390 = vmatpush.msra.mxu0 %v349
    %391 = vmatpush.msra.mxu0 %v347
    %392 = vmatpush.msra.mxu0 %v345
    %393 = vmatpush.msra.mxu0 %v343
    %394 = vmatpush.msra.mxu0 %v341
    %395 = vmatpush.msra.mxu0 %v339
    %396 = vmatpush.msra.mxu0 %v337
    %397 = vmatpush.msra.mxu0 %v335
    %398 = vmatmul.f32.gmra.mxu0 %v359
    %v399 = vpop.f32.mrf.mxu0
    %v400 = vadd.f32 0.0, %v399
    %401 = vmatmul.f32.gmra.mxu0 %v362
    %v402 = vpop.f32.mrf.mxu0
    %v403 = vadd.f32 0.0, %v402
    %404 = vmatmul.f32.gmra.mxu0 %v365
    %v405 = vpop.f32.mrf.mxu0
    %v406 = vadd.f32 0.0, %v405
    %407 = vmatmul.f32.gmra.mxu0 %v368
    %v408 = vpop.f32.mrf.mxu0
    %v409 = vadd.f32 0.0, %v408
    %410 = vmatmul.f32.gmra.mxu0 %v371
    %v411 = vpop.f32.mrf.mxu0
    %v412 = vadd.f32 0.0, %v411
    %413 = vmatmul.f32.gmra.mxu0 %v374
    %v414 = vpop.f32.mrf.mxu0
    %v415 = vadd.f32 0.0, %v414
    %416 = vmatmul.f32.gmra.mxu0 %v377
    %v417 = vpop.f32.mrf.mxu0
    %v418 = vadd.f32 0.0, %v417
    %419 = vmatmul.f32.gmra.mxu0 %v380
    %v420 = vpop.f32.mrf.mxu0
    %v421 = vadd.f32 0.0, %v420
    %422 = vdwg.mxu0
    %424 = vrot.lane.b32.xlu0 %v403, 8
    %v425 = vpop.permute.xlu0 %424
    %428 = vrot.lane.b32.xlu0 %v406, 16
    %v429 = vpop.permute.xlu0 %428
    %432 = vrot.lane.b32.xlu0 %v409, 24
    %v433 = vpop.permute.xlu0 %432
    %v435 = vsel %vm171, %v400, %v425
    %vm436 = vcmask 130048
    %v437 = vsel %vm436, %v435, %v429
    %vm438 = vcmask 195584
    %v439 = vsel %vm438, %v437, %v433
    %441 = vrot.lane.b32.xlu0 %v415, 8
    %v442 = vpop.permute.xlu0 %441
    %445 = vrot.lane.b32.xlu0 %v418, 16
    %v446 = vpop.permute.xlu0 %445
    %449 = vrot.lane.b32.xlu0 %v421, 24
    %v450 = vpop.permute.xlu0 %449
    %v452 = vsel %vm171, %v412, %v442
    %v453 = vsel %vm436, %v452, %v446
    %v454 = vsel %vm438, %v453, %v450
    %v455 = vld [vmem:[#allocation8] sm:$0xff]
    %v456 = vld [vmem:[#allocation8 + $0x8] sm:$0xff]
    %v457 = vld [vmem:[#allocation8 + $0x10] sm:$0xff]
    %v458 = vld [vmem:[#allocation8 + $0x18] sm:$0xff]
    %v459 = vld [vmem:[%s5] sm:$0x1]
    %v461 = vperm.slane %v459, 0
    %v464 = vsel %vm103, %v439, 0
    %v467 = vsel %vm103, %v454, 0
    %469 = vmatpush.msra.mxu0 0.0
    %470 = vmatpush.msra.mxu0 0.0
    %471 = vmatpush.msra.mxu0 0.0
    %472 = vmatpush.msra.mxu0 0.0
    %473 = vmatpush.msra.mxu0 0.0
    %474 = vmatpush.msra.mxu0 0.0
    %475 = vmatpush.msra.mxu0 0.0
    %476 = vmatpush.msra.mxu0 0.0
    %477 = vmatpush.msra.mxu0 0.0
    %478 = vmatpush.msra.mxu0 0.0
    %479 = vmatpush.msra.mxu0 0.0
    %480 = vmatpush.msra.mxu0 0.0
    %481 = vmatpush.msra.mxu0 %v458
    %482 = vmatpush.msra.mxu0 %v457
    %483 = vmatpush.msra.mxu0 %v456
    %484 = vmatpush.msra.mxu0 %v455
    %485 = vmatmul.f32.gmra.mxu0 %v464
    %v486 = vpop.f32.mrf.mxu0
    %v487 = vadd.f32 %v461, %v486
    %488 = vmatmul.f32.gmra.mxu0 %v467
    %v489 = vpop.f32.mrf.mxu0
    %v490 = vadd.f32 %v461, %v489
    %491 = vdwg.mxu0
    %v492 = vsel %vm103, %v487, 0.0
    %493 = vadd.xlane.f32.xlu0 %v492
    %v494 = vpop.xlane.xlu0 %493
    %v495 = vsel %vm103, %v490, 0.0
    %496 = vadd.xlane.f32.xlu0 %v495
    %v497 = vpop.xlane.xlu0 %496
    %v498 = vrcp.pop 32.0
    %v499 = vmul.f32 32.0, %v498
    %v500 = vsub.f32 1.0, %v499
    %v501 = vmul.f32 %v498, %v500
    %v502 = vadd.f32 %v498, %v501
    %vm503 = vweird.f32 %v498
    %v504 = vsel %vm503, %v498, %v502
    %v505 = vmul.f32 %v494, %v504
    %v506 = vmul.f32 %v497, %v504
    %v507 = vmul.f32 %v487, %v487
    %v508 = vmul.f32 %v490, %v490
    %v509 = vsel %vm103, %v507, 0.0
    %510 = vadd.xlane.f32.xlu0 %v509
    %v511 = vpop.xlane.xlu0 %510
    %v512 = vsel %vm103, %v508, 0.0
    %513 = vadd.xlane.f32.xlu0 %v512
    %v514 = vpop.xlane.xlu0 %513
    %v515 = vmul.f32 %v511, %v504
    %v516 = vmul.f32 %v514, %v504
    %v517 = vmul.f32 %v505, %v505
    %v518 = vmul.f32 %v506, %v506
    %v519 = vsub.f32 %v515, %v517
    %v520 = vsub.f32 %v516, %v518
    %v521 = vsub.f32 %v487, %v505
    %v522 = vsub.f32 %v490, %v506
    %v523 = vadd.f32 %v519, 1e-05
    %v524 = vadd.f32 %v520, 1e-05
    %v525 = vrsqrt.pop %v523
    %v526 = vmul.f32 %v525, %v523
    %v527 = vmul.f32 %v526, %v525
    %v528 = vmul.f32 0.5, %v527
    %v529 = vsub.f32 1.5, %v528
    %v530 = vmul.f32 %v525, %v529
    %vm531 = vweird.f32 %v523
    %vm532 = vweird.f32 %v525
    %vm533 = vmor %vm531, %vm532
    %v534 = vsel %vm533, %v525, %v530
    %v535 = vrsqrt.pop %v524
    %v536 = vmul.f32 %v535, %v524
    %v537 = vmul.f32 %v536, %v535
    %v538 = vmul.f32 0.5, %v537
    %v539 = vsub.f32 1.5, %v538
    %v540 = vmul.f32 %v535, %v539
    %vm541 = vweird.f32 %v524
    %vm542 = vweird.f32 %v535
    %vm543 = vmor %vm541, %vm542
    %v544 = vsel %vm543, %v535, %v540
    %v545 = vmul.f32 %v521, %v534
    %v546 = vmul.f32 %v522, %v544
    %v547 = vld [vmem:[%s6] sm:$0x1]
    %v549 = vperm.slane %v547, 0
    %v551 = vmul.f32 %v545, %v549
    %v552 = vmul.f32 %v546, %v549
    %v553 = vld [vmem:[%s7] sm:$0x1]
    %v555 = vperm.slane %v553, 0
    %v557 = vadd.f32 %v551, %v555
    %v558 = vadd.f32 %v552, %v555
    %559 = vst.msk [vmem:[#allocation10] sm:$0xff] %vm103, %v557
    %560 = vst.msk [vmem:[#allocation10 + $0x8] sm:$0xff] %vm103, %v558
    // Predicated region
    $region50: #{tpu_custom_call.1} parent=1 // pred_check
      _
    $region51: #{tpu_custom_call.1} parent=1 // pred_check_branch
      %562 = sbr.rel (0) target = $region53
    $region52: #{tpu_custom_call.1} parent=1 // pred_region
      %564 = vsyncadd [#allocation4], 0
      %s565 = sshll.u32 [#allocation10], 4
      %s566 = int_to_ptr.vmem [resolvable:$true] %s565
      %s567 = sshll.u32 %s8, 4
      %s568 = int_to_ptr.hbm [resolvable:$true] %s567
      %573 = dma.vmem_to_hbm [thread:$0]  %s566, 256, %s568, [#allocation4], 128, 128, 8
    $region53: #{tpu_custom_call.1} parent=1 // pred_fallthru
      _
    // Predicated region
    $region54: #{tpu_custom_call.1} parent=1 // pred_check
      _
    $region55: #{tpu_custom_call.1} parent=1 // pred_check_branch
      %575 = sbr.rel (0) target = $region57
    $region56: #{tpu_custom_call.1} parent=1 // pred_region
      %577 = dma.done [#allocation4], 256
    $region57: #{tpu_custom_call.1} parent=1 // pred_fallthru
      _
    %578 = vsyncpa [#allocation3], 1
    %579 = vsyncpa [#allocation6], 1
    %580 = vsyncpa [#allocation9], 1
    %581 = vsyncpa [#allocation4], 1

</llo_original>
